<compile_context>
chip_gen: v6e
topology: v6e:2x2x1
jax: 0.10.0
libtpu: 0.0.40
codegen_flags: <defaults>
</compile_context>

<pallas_src>
import jax
import jax.numpy as jnp
from jax.experimental import pallas as pl
from jax.experimental.pallas import tpu as pltpu


INPUT_DIM = 2025          # module default (45*45), flattened in forward()
INPUT_DIM_PAD = 2048      # lane-aligned K for the first (largest) matmul
HIDDEN_PAD = 128          # 64-wide hidden layers padded to 128 lanes
OUT_PAD = 128             # lane-dense padded logits / output width
NUM_CLASSES = 4
NEG_FILL = -1e30          # bias fill for padded logit columns -> exp() == 0


def _round_up(n, m):
    return (n + m - 1) // m * m


def _mlp_softmax_kernel(x_ref,
                        w1, b1, w2, b2, w3, b3, w4, b4,
                        w5, b5, w6, b6, w7, b7, w8, b8,
                        out_ref):
    """Fused MLP forward: 7x (Linear + ReLU), final Linear, row softmax."""
    h = x_ref[...]  # (TB, 2048) bf16

    def linear_relu(h, w_ref, b_ref):
        # bf16 x bf16 on the MXU, f32 accumulation, f32 bias add, ReLU,
        # cast back to bf16 to feed the next matmul.
        y = jnp.dot(h, w_ref[...], preferred_element_type=jnp.float32) + b_ref[...]
        return jnp.maximum(y, 0.0).astype(jnp.bfloat16)

    h = linear_relu(h, w1, b1)   # (TB, 256)
    h = linear_relu(h, w2, b2)   # (TB, 128)
    h = linear_relu(h, w3, b3)   # (TB, 128)
    h = linear_relu(h, w4, b4)   # (TB, 128)
    h = linear_relu(h, w5, b5)   # (TB, 128)
    h = linear_relu(h, w6, b6)   # (TB, 128)  (64 real + 64 exact-zero pads)
    h = linear_relu(h, w7, b7)   # (TB, 128)

    # Final linear on a 128-wide padded tile; padded columns carry bias
    # NEG_FILL so exp() underflows to exactly 0 and the softmax sum is exact.
    logits = jnp.dot(h, w8[...], preferred_element_type=jnp.float32) + b8[...]  # (TB, 128)

    m = jnp.max(logits, axis=-1, keepdims=True)
    e = jnp.exp(logits - m)
    s = jnp.sum(e, axis=-1, keepdims=True)
    out_ref[...] = e * pl.reciprocal(s, approx=True)


def init_params(key, input_dim=INPUT_DIM):
    """Deterministic f32 parameters mirroring the nn.Linear shapes (unpadded)."""
    dims = [(input_dim, 256), (256, 128), (128, 128), (128, 128),
            (128, 128), (128, 64), (64, 64), (64, 4)]
    params = []
    for (fan_in, fan_out) in dims:
        key, kw, kb = jax.random.split(key, 3)
        bound = 1.0 / jnp.sqrt(fan_in)
        w = jax.random.uniform(kw, (fan_in, fan_out), jnp.float32, -bound, bound)
        b = jax.random.uniform(kb, (1, fan_out), jnp.float32, -bound, bound)
        params.append((w, b))
    return params


def prepare_params(params):
    """Pad to lane-aligned shapes and cast weights to bf16 (done once)."""
    def pad2(a, rows, cols, fill=0.0):
        r, c = a.shape
        return jnp.pad(a, ((0, rows - r), (0, cols - c)), constant_values=fill)

    (w1, b1), (w2, b2), (w3, b3), (w4, b4), (w5, b5), (w6, b6), (w7, b7), (w8, b8) = params

    w1p = pad2(w1, INPUT_DIM_PAD, 256)                      # zero rows for padded K
    w6p = pad2(w6, 128, HIDDEN_PAD)                         # 64 -> 128 out features
    b6p = pad2(b6, 1, HIDDEN_PAD)
    w7p = pad2(w7, HIDDEN_PAD, HIDDEN_PAD)                  # 64 -> 128 in & out
    b7p = pad2(b7, 1, HIDDEN_PAD)
    w8p = pad2(w8, HIDDEN_PAD, OUT_PAD)                     # 64 -> 128 in, 4 -> 128 out
    b8p = pad2(b8, 1, OUT_PAD, fill=NEG_FILL)               # padded logits -> -1e30

    padded = [(w1p, b1), (w2, b2), (w3, b3), (w4, b4), (w5, b5),
              (w6p, b6p), (w7p, b7p), (w8p, b8p)]
    # bf16 weights halve the dominant HBM->VMEM DMA; biases stay f32 (tiny).
    return [(w.astype(jnp.bfloat16), b.astype(jnp.float32)) for w, b in padded]


def simple_multilayer_forward(x, prepared_params, *, block_b=256):
    """x: (B, ...) float; prepared_params from prepare_params(). Returns (B, 4)."""
    B = x.shape[0]
    x = x.reshape(B, -1)                         # mirrors x.view(x.size(0), -1)

    tb = min(block_b, _round_up(B, 8))           # batch tile (multiple of 8 sublanes)
    b_pad = _round_up(B, tb)

    x = x.astype(jnp.bfloat16)
    x = jnp.pad(x, ((0, b_pad - B), (0, INPUT_DIM_PAD - x.shape[1])))

    flat = []
    for w, b in prepared_params:
        flat.extend([w, b])

    # Weights/biases: full-array blocks, constant block index -> fetched once,
    # VMEM-resident across all batch-grid steps.
    weight_specs = [pl.BlockSpec(arr.shape, lambda i: (0, 0)) for arr in flat]

    out = pl.pallas_call(
        _mlp_softmax_kernel,
        out_shape=jax.ShapeDtypeStruct((b_pad, OUT_PAD), jnp.float32),
        grid=(b_pad // tb,),
        in_specs=[pl.BlockSpec((tb, INPUT_DIM_PAD), lambda i: (i, 0))] + weight_specs,
        out_specs=pl.BlockSpec((tb, OUT_PAD), lambda i: (i, 0)),
        compiler_params=pltpu.CompilerParams(
            dimension_semantics=("parallel",),   # shard batch steps across TCs on v7x
            vmem_limit_bytes=16 << 20),
    )(x, *flat)

    return out[:B, :NUM_CLASSES]


def reference_forward(x, params):
    """Pure-JAX reference mirroring the kernel's bf16-weight / f32-accum numerics."""
    h = x.reshape(x.shape[0], -1).astype(jnp.bfloat16)
    for w, b in params[:-1]:
        y = jnp.dot(h, w.astype(jnp.bfloat16), preferred_element_type=jnp.float32) + b
        h = jnp.maximum(y, 0.0).astype(jnp.bfloat16)
    w8, b8 = params[-1]
    logits = jnp.dot(h, w8.astype(jnp.bfloat16), preferred_element_type=jnp.float32) + b8
    return jax.nn.softmax(logits, axis=1)


if __name__ == "__main__":
    key = jax.random.PRNGKey(0)
    key, kx, kp = jax.random.split(key, 3)

    batch = 8
    x = jax.random.normal(kx, (batch, INPUT_DIM), jnp.float32)

    params = init_params(kp, input_dim=INPUT_DIM)
    prepared = prepare_params(params)

    out = simple_multilayer_forward(x, prepared)
    out = jax.block_until_ready(out)

    ref = reference_forward(x, params)
    assert out.shape == (batch, NUM_CLASSES)
    assert jnp.allclose(out, ref, atol=2e-3, rtol=2e-2), "mismatch vs reference"
    assert jnp.allclose(jnp.sum(out, axis=1), 1.0, atol=2e-3), "softmax rows must sum to 1"

    print("KERNEL_OK")
</pallas_src>

<mosaic_0001>
module attributes {stable_mosaic.version = 11 : i64} {
  func.func @_mlp_softmax_kernel(%arg0: i32, %arg1: memref<8x2048xbf16, #tpu.memory_space<vmem>>, %arg2: memref<2048x256xbf16, #tpu.memory_space<vmem>>, %arg3: memref<1x256xf32, #tpu.memory_space<vmem>>, %arg4: memref<256x128xbf16, #tpu.memory_space<vmem>>, %arg5: memref<1x128xf32, #tpu.memory_space<vmem>>, %arg6: memref<128x128xbf16, #tpu.memory_space<vmem>>, %arg7: memref<1x128xf32, #tpu.memory_space<vmem>>, %arg8: memref<128x128xbf16, #tpu.memory_space<vmem>>, %arg9: memref<1x128xf32, #tpu.memory_space<vmem>>, %arg10: memref<128x128xbf16, #tpu.memory_space<vmem>>, %arg11: memref<1x128xf32, #tpu.memory_space<vmem>>, %arg12: memref<128x128xbf16, #tpu.memory_space<vmem>>, %arg13: memref<1x128xf32, #tpu.memory_space<vmem>>, %arg14: memref<128x128xbf16, #tpu.memory_space<vmem>>, %arg15: memref<1x128xf32, #tpu.memory_space<vmem>>, %arg16: memref<128x128xbf16, #tpu.memory_space<vmem>>, %arg17: memref<1x128xf32, #tpu.memory_space<vmem>>, %arg18: memref<8x128xf32, #tpu.memory_space<vmem>>) attributes {dimension_semantics = [#tpu.dimension_semantics<parallel>], iteration_bounds = array<i64: 1>, scalar_prefetch = 0 : i64, scratch_operands = 0 : i64, tpu.core_type = #tpu.core_type<tc>, window_params = [{transform_indices = @transform_0, window_bounds = array<i64: 8, 2048>}, {pipeline_mode = #tpu.pipeline_mode<synchronous>, transform_indices = @transform_1, window_bounds = array<i64: 2048, 256>}, {pipeline_mode = #tpu.pipeline_mode<synchronous>, transform_indices = @transform_2, window_bounds = array<i64: 1, 256>}, {pipeline_mode = #tpu.pipeline_mode<synchronous>, transform_indices = @transform_3, window_bounds = array<i64: 256, 128>}, {pipeline_mode = #tpu.pipeline_mode<synchronous>, transform_indices = @transform_4, window_bounds = array<i64: 1, 128>}, {pipeline_mode = #tpu.pipeline_mode<synchronous>, transform_indices = @transform_5, window_bounds = array<i64: 128, 128>}, {pipeline_mode = #tpu.pipeline_mode<synchronous>, transform_indices = @transform_6, window_bounds = array<i64: 1, 128>}, {pipeline_mode = #tpu.pipeline_mode<synchronous>, transform_indices = @transform_7, window_bounds = array<i64: 128, 128>}, {pipeline_mode = #tpu.pipeline_mode<synchronous>, transform_indices = @transform_8, window_bounds = array<i64: 1, 128>}, {pipeline_mode = #tpu.pipeline_mode<synchronous>, transform_indices = @transform_9, window_bounds = array<i64: 128, 128>}, {pipeline_mode = #tpu.pipeline_mode<synchronous>, transform_indices = @transform_10, window_bounds = array<i64: 1, 128>}, {pipeline_mode = #tpu.pipeline_mode<synchronous>, transform_indices = @transform_11, window_bounds = array<i64: 128, 128>}, {pipeline_mode = #tpu.pipeline_mode<synchronous>, transform_indices = @transform_12, window_bounds = array<i64: 1, 128>}, {pipeline_mode = #tpu.pipeline_mode<synchronous>, transform_indices = @transform_13, window_bounds = array<i64: 128, 128>}, {pipeline_mode = #tpu.pipeline_mode<synchronous>, transform_indices = @transform_14, window_bounds = array<i64: 1, 128>}, {pipeline_mode = #tpu.pipeline_mode<synchronous>, transform_indices = @transform_15, window_bounds = array<i64: 128, 128>}, {pipeline_mode = #tpu.pipeline_mode<synchronous>, transform_indices = @transform_16, window_bounds = array<i64: 1, 128>}, {transform_indices = @transform_17, window_bounds = array<i64: 8, 128>}]} {
    %c0 = arith.constant 0 : index
    %c0_0 = arith.constant 0 : index
    %0 = vector.load %arg1[%c0, %c0_0] : memref<8x2048xbf16, #tpu.memory_space<vmem>>, vector<8x2048xbf16>
    %c0_1 = arith.constant 0 : index
    %c0_2 = arith.constant 0 : index
    %1 = vector.load %arg2[%c0_1, %c0_2] : memref<2048x256xbf16, #tpu.memory_space<vmem>>, vector<2048x256xbf16>
    %cst = arith.constant dense<0.000000e+00> : vector<8x256xf32>
    %2 = tpu.matmul %0, %1, %cst {dimension_numbers = #tpu.dot_dimension_numbers<[1], [0], [0], [1], [0, 0, 1, 1], [], []>} : vector<8x2048xbf16>, vector<2048x256xbf16>, vector<8x256xf32> -> vector<8x256xf32>
    %c0_3 = arith.constant 0 : index
    %c0_4 = arith.constant 0 : index
    %3 = vector.load %arg3[%c0_3, %c0_4] : memref<1x256xf32, #tpu.memory_space<vmem>>, vector<1x256xf32>
    %4 = vector.broadcast %3 : vector<1x256xf32> to vector<8x256xf32>
    %5 = arith.addf %2, %4 : vector<8x256xf32>
    %cst_5 = arith.constant 0.000000e+00 : f32
    %6 = vector.broadcast %cst_5 : f32 to vector<8x256xf32>
    %7 = arith.maximumf %5, %6 : vector<8x256xf32>
    %8 = arith.truncf %7 : vector<8x256xf32> to vector<8x256xbf16>
    %c0_6 = arith.constant 0 : index
    %c0_7 = arith.constant 0 : index
    %9 = vector.load %arg4[%c0_6, %c0_7] : memref<256x128xbf16, #tpu.memory_space<vmem>>, vector<256x128xbf16>
    %cst_8 = arith.constant dense<0.000000e+00> : vector<8x128xf32>
    %10 = tpu.matmul %8, %9, %cst_8 {dimension_numbers = #tpu.dot_dimension_numbers<[1], [0], [0], [1], [0, 0, 1, 1], [], []>} : vector<8x256xbf16>, vector<256x128xbf16>, vector<8x128xf32> -> vector<8x128xf32>
    %c0_9 = arith.constant 0 : index
    %c0_10 = arith.constant 0 : index
    %11 = vector.load %arg5[%c0_9, %c0_10] : memref<1x128xf32, #tpu.memory_space<vmem>>, vector<1x128xf32>
    %12 = vector.broadcast %11 : vector<1x128xf32> to vector<8x128xf32>
    %13 = arith.addf %10, %12 : vector<8x128xf32>
    %cst_11 = arith.constant 0.000000e+00 : f32
    %14 = vector.broadcast %cst_11 : f32 to vector<8x128xf32>
    %15 = arith.maximumf %13, %14 : vector<8x128xf32>
    %16 = arith.truncf %15 : vector<8x128xf32> to vector<8x128xbf16>
    %c0_12 = arith.constant 0 : index
    %c0_13 = arith.constant 0 : index
    %17 = vector.load %arg6[%c0_12, %c0_13] : memref<128x128xbf16, #tpu.memory_space<vmem>>, vector<128x128xbf16>
    %cst_14 = arith.constant dense<0.000000e+00> : vector<8x128xf32>
    %18 = tpu.matmul %16, %17, %cst_14 {dimension_numbers = #tpu.dot_dimension_numbers<[1], [0], [0], [1], [0, 0, 1, 1], [], []>} : vector<8x128xbf16>, vector<128x128xbf16>, vector<8x128xf32> -> vector<8x128xf32>
    %c0_15 = arith.constant 0 : index
    %c0_16 = arith.constant 0 : index
    %19 = vector.load %arg7[%c0_15, %c0_16] : memref<1x128xf32, #tpu.memory_space<vmem>>, vector<1x128xf32>
    %20 = vector.broadcast %19 : vector<1x128xf32> to vector<8x128xf32>
    %21 = arith.addf %18, %20 : vector<8x128xf32>
    %cst_17 = arith.constant 0.000000e+00 : f32
    %22 = vector.broadcast %cst_17 : f32 to vector<8x128xf32>
    %23 = arith.maximumf %21, %22 : vector<8x128xf32>
    %24 = arith.truncf %23 : vector<8x128xf32> to vector<8x128xbf16>
    %c0_18 = arith.constant 0 : index
    %c0_19 = arith.constant 0 : index
    %25 = vector.load %arg8[%c0_18, %c0_19] : memref<128x128xbf16, #tpu.memory_space<vmem>>, vector<128x128xbf16>
    %cst_20 = arith.constant dense<0.000000e+00> : vector<8x128xf32>
    %26 = tpu.matmul %24, %25, %cst_20 {dimension_numbers = #tpu.dot_dimension_numbers<[1], [0], [0], [1], [0, 0, 1, 1], [], []>} : vector<8x128xbf16>, vector<128x128xbf16>, vector<8x128xf32> -> vector<8x128xf32>
    %c0_21 = arith.constant 0 : index
    %c0_22 = arith.constant 0 : index
    %27 = vector.load %arg9[%c0_21, %c0_22] : memref<1x128xf32, #tpu.memory_space<vmem>>, vector<1x128xf32>
    %28 = vector.broadcast %27 : vector<1x128xf32> to vector<8x128xf32>
    %29 = arith.addf %26, %28 : vector<8x128xf32>
    %cst_23 = arith.constant 0.000000e+00 : f32
    %30 = vector.broadcast %cst_23 : f32 to vector<8x128xf32>
    %31 = arith.maximumf %29, %30 : vector<8x128xf32>
    %32 = arith.truncf %31 : vector<8x128xf32> to vector<8x128xbf16>
    %c0_24 = arith.constant 0 : index
    %c0_25 = arith.constant 0 : index
    %33 = vector.load %arg10[%c0_24, %c0_25] : memref<128x128xbf16, #tpu.memory_space<vmem>>, vector<128x128xbf16>
    %cst_26 = arith.constant dense<0.000000e+00> : vector<8x128xf32>
    %34 = tpu.matmul %32, %33, %cst_26 {dimension_numbers = #tpu.dot_dimension_numbers<[1], [0], [0], [1], [0, 0, 1, 1], [], []>} : vector<8x128xbf16>, vector<128x128xbf16>, vector<8x128xf32> -> vector<8x128xf32>
    %c0_27 = arith.constant 0 : index
    %c0_28 = arith.constant 0 : index
    %35 = vector.load %arg11[%c0_27, %c0_28] : memref<1x128xf32, #tpu.memory_space<vmem>>, vector<1x128xf32>
    %36 = vector.broadcast %35 : vector<1x128xf32> to vector<8x128xf32>
    %37 = arith.addf %34, %36 : vector<8x128xf32>
    %cst_29 = arith.constant 0.000000e+00 : f32
    %38 = vector.broadcast %cst_29 : f32 to vector<8x128xf32>
    %39 = arith.maximumf %37, %38 : vector<8x128xf32>
    %40 = arith.truncf %39 : vector<8x128xf32> to vector<8x128xbf16>
    %c0_30 = arith.constant 0 : index
    %c0_31 = arith.constant 0 : index
    %41 = vector.load %arg12[%c0_30, %c0_31] : memref<128x128xbf16, #tpu.memory_space<vmem>>, vector<128x128xbf16>
    %cst_32 = arith.constant dense<0.000000e+00> : vector<8x128xf32>
    %42 = tpu.matmul %40, %41, %cst_32 {dimension_numbers = #tpu.dot_dimension_numbers<[1], [0], [0], [1], [0, 0, 1, 1], [], []>} : vector<8x128xbf16>, vector<128x128xbf16>, vector<8x128xf32> -> vector<8x128xf32>
    %c0_33 = arith.constant 0 : index
    %c0_34 = arith.constant 0 : index
    %43 = vector.load %arg13[%c0_33, %c0_34] : memref<1x128xf32, #tpu.memory_space<vmem>>, vector<1x128xf32>
    %44 = vector.broadcast %43 : vector<1x128xf32> to vector<8x128xf32>
    %45 = arith.addf %42, %44 : vector<8x128xf32>
    %cst_35 = arith.constant 0.000000e+00 : f32
    %46 = vector.broadcast %cst_35 : f32 to vector<8x128xf32>
    %47 = arith.maximumf %45, %46 : vector<8x128xf32>
    %48 = arith.truncf %47 : vector<8x128xf32> to vector<8x128xbf16>
    %c0_36 = arith.constant 0 : index
    %c0_37 = arith.constant 0 : index
    %49 = vector.load %arg14[%c0_36, %c0_37] : memref<128x128xbf16, #tpu.memory_space<vmem>>, vector<128x128xbf16>
    %cst_38 = arith.constant dense<0.000000e+00> : vector<8x128xf32>
    %50 = tpu.matmul %48, %49, %cst_38 {dimension_numbers = #tpu.dot_dimension_numbers<[1], [0], [0], [1], [0, 0, 1, 1], [], []>} : vector<8x128xbf16>, vector<128x128xbf16>, vector<8x128xf32> -> vector<8x128xf32>
    %c0_39 = arith.constant 0 : index
    %c0_40 = arith.constant 0 : index
    %51 = vector.load %arg15[%c0_39, %c0_40] : memref<1x128xf32, #tpu.memory_space<vmem>>, vector<1x128xf32>
    %52 = vector.broadcast %51 : vector<1x128xf32> to vector<8x128xf32>
    %53 = arith.addf %50, %52 : vector<8x128xf32>
    %cst_41 = arith.constant 0.000000e+00 : f32
    %54 = vector.broadcast %cst_41 : f32 to vector<8x128xf32>
    %55 = arith.maximumf %53, %54 : vector<8x128xf32>
    %56 = arith.truncf %55 : vector<8x128xf32> to vector<8x128xbf16>
    %c0_42 = arith.constant 0 : index
    %c0_43 = arith.constant 0 : index
    %57 = vector.load %arg16[%c0_42, %c0_43] : memref<128x128xbf16, #tpu.memory_space<vmem>>, vector<128x128xbf16>
    %cst_44 = arith.constant dense<0.000000e+00> : vector<8x128xf32>
    %58 = tpu.matmul %56, %57, %cst_44 {dimension_numbers = #tpu.dot_dimension_numbers<[1], [0], [0], [1], [0, 0, 1, 1], [], []>} : vector<8x128xbf16>, vector<128x128xbf16>, vector<8x128xf32> -> vector<8x128xf32>
    %c0_45 = arith.constant 0 : index
    %c0_46 = arith.constant 0 : index
    %59 = vector.load %arg17[%c0_45, %c0_46] : memref<1x128xf32, #tpu.memory_space<vmem>>, vector<1x128xf32>
    %60 = vector.broadcast %59 : vector<1x128xf32> to vector<8x128xf32>
    %61 = arith.addf %58, %60 : vector<8x128xf32>
    %cst_47 = arith.constant dense<0xFF800000> : vector<8xf32>
    %62 = vector.multi_reduction <maximumf>, %61, %cst_47 [1] : vector<8x128xf32> to vector<8xf32>
    %63 = vector.shape_cast %62 : vector<8xf32> to vector<8x1xf32>
    %64 = vector.broadcast %63 : vector<8x1xf32> to vector<8x128xf32>
    %65 = arith.subf %61, %64 : vector<8x128xf32>
    %66 = math.exp %65 : vector<8x128xf32>
    %cst_48 = arith.constant dense<0.000000e+00> : vector<8xf32>
    %67 = vector.multi_reduction <add>, %66, %cst_48 [1] : vector<8x128xf32> to vector<8xf32>
    %68 = vector.shape_cast %67 : vector<8xf32> to vector<8x1xf32>
    %69 = tpu.reciprocal %68 {approx = true} : vector<8x1xf32> -> vector<8x1xf32>
    %70 = vector.broadcast %69 : vector<8x1xf32> to vector<8x128xf32>
    %71 = arith.mulf %66, %70 : vector<8x128xf32>
    %c0_49 = arith.constant 0 : index
    %c0_50 = arith.constant 0 : index
    %72 = vector.load %arg18[%c0_49, %c0_50] : memref<8x128xf32, #tpu.memory_space<vmem>>, vector<8x128xf32>
    tpu.vector_store %arg18[%c0_49, %c0_50], %71 {strides = array<i32>} : memref<8x128xf32, #tpu.memory_space<vmem>>, vector<8x128xf32>,
    return
  }
  func.func @transform_0(%arg0: i32) -> (i32, i32) {
    %c0_i32 = arith.constant 0 : i32
    %c0_i32_0 = arith.constant 0 : i32
    return %arg0, %c0_i32 : i32, i32
  }
  func.func @transform_1(%arg0: i32) -> (i32, i32) {
    %c0_i32 = arith.constant 0 : i32
    %c0_i32_0 = arith.constant 0 : i32
    %c0_i32_1 = arith.constant 0 : i32
    return %c0_i32, %c0_i32_0 : i32, i32
  }
  func.func @transform_2(%arg0: i32) -> (i32, i32) {
    %c0_i32 = arith.constant 0 : i32
    %c0_i32_0 = arith.constant 0 : i32
    %c0_i32_1 = arith.constant 0 : i32
    return %c0_i32, %c0_i32_0 : i32, i32
  }
  func.func @transform_3(%arg0: i32) -> (i32, i32) {
    %c0_i32 = arith.constant 0 : i32
    %c0_i32_0 = arith.constant 0 : i32
    %c0_i32_1 = arith.constant 0 : i32
    return %c0_i32, %c0_i32_0 : i32, i32
  }
  func.func @transform_4(%arg0: i32) -> (i32, i32) {
    %c0_i32 = arith.constant 0 : i32
    %c0_i32_0 = arith.constant 0 : i32
    %c0_i32_1 = arith.constant 0 : i32
    return %c0_i32, %c0_i32_0 : i32, i32
  }
  func.func @transform_5(%arg0: i32) -> (i32, i32) {
    %c0_i32 = arith.constant 0 : i32
    %c0_i32_0 = arith.constant 0 : i32
    %c0_i32_1 = arith.constant 0 : i32
    return %c0_i32, %c0_i32_0 : i32, i32
  }
  func.func @transform_6(%arg0: i32) -> (i32, i32) {
    %c0_i32 = arith.constant 0 : i32
    %c0_i32_0 = arith.constant 0 : i32
    %c0_i32_1 = arith.constant 0 : i32
    return %c0_i32, %c0_i32_0 : i32, i32
  }
  func.func @transform_7(%arg0: i32) -> (i32, i32) {
    %c0_i32 = arith.constant 0 : i32
    %c0_i32_0 = arith.constant 0 : i32
    %c0_i32_1 = arith.constant 0 : i32
    return %c0_i32, %c0_i32_0 : i32, i32
  }
  func.func @transform_8(%arg0: i32) -> (i32, i32) {
    %c0_i32 = arith.constant 0 : i32
    %c0_i32_0 = arith.constant 0 : i32
    %c0_i32_1 = arith.constant 0 : i32
    return %c0_i32, %c0_i32_0 : i32, i32
  }
  func.func @transform_9(%arg0: i32) -> (i32, i32) {
    %c0_i32 = arith.constant 0 : i32
    %c0_i32_0 = arith.constant 0 : i32
    %c0_i32_1 = arith.constant 0 : i32
    return %c0_i32, %c0_i32_0 : i32, i32
  }
  func.func @transform_10(%arg0: i32) -> (i32, i32) {
    %c0_i32 = arith.constant 0 : i32
    %c0_i32_0 = arith.constant 0 : i32
    %c0_i32_1 = arith.constant 0 : i32
    return %c0_i32, %c0_i32_0 : i32, i32
  }
  func.func @transform_11(%arg0: i32) -> (i32, i32) {
    %c0_i32 = arith.constant 0 : i32
    %c0_i32_0 = arith.constant 0 : i32
    %c0_i32_1 = arith.constant 0 : i32
    return %c0_i32, %c0_i32_0 : i32, i32
  }
  func.func @transform_12(%arg0: i32) -> (i32, i32) {
    %c0_i32 = arith.constant 0 : i32
    %c0_i32_0 = arith.constant 0 : i32
    %c0_i32_1 = arith.constant 0 : i32
    return %c0_i32, %c0_i32_0 : i32, i32
  }
  func.func @transform_13(%arg0: i32) -> (i32, i32) {
    %c0_i32 = arith.constant 0 : i32
    %c0_i32_0 = arith.constant 0 : i32
    %c0_i32_1 = arith.constant 0 : i32
    return %c0_i32, %c0_i32_0 : i32, i32
  }
  func.func @transform_14(%arg0: i32) -> (i32, i32) {
    %c0_i32 = arith.constant 0 : i32
    %c0_i32_0 = arith.constant 0 : i32
    %c0_i32_1 = arith.constant 0 : i32
    return %c0_i32, %c0_i32_0 : i32, i32
  }
  func.func @transform_15(%arg0: i32) -> (i32, i32) {
    %c0_i32 = arith.constant 0 : i32
    %c0_i32_0 = arith.constant 0 : i32
    %c0_i32_1 = arith.constant 0 : i32
    return %c0_i32, %c0_i32_0 : i32, i32
  }
  func.func @transform_16(%arg0: i32) -> (i32, i32) {
    %c0_i32 = arith.constant 0 : i32
    %c0_i32_0 = arith.constant 0 : i32
    %c0_i32_1 = arith.constant 0 : i32
    return %c0_i32, %c0_i32_0 : i32, i32
  }
  func.func @transform_17(%arg0: i32) -> (i32, i32) {
    %c0_i32 = arith.constant 0 : i32
    %c0_i32_0 = arith.constant 0 : i32
    return %arg0, %c0_i32 : i32, i32
  }
}

</mosaic_0001>

<llo_original>
// kernel: tpu_custom_call.1
$region0: #{tpu_custom_call.1}
  #allocation0 [shape = 'u32[]', space=smem, size = 0x4, offset = 0x4, fixed_abs, tag = 'smem constant byte address 0x4 - core index']
  #allocation1 [shape = 'u32[144,128]{1,0:T(1,128)}', space=vmem, size = 0x12000, scoped, tag = 'internal scratch']
  %s0 = inlined_call_operand.hbm [shape: bf16[8,2048], index: 0, kind: input, shape index: {}]
  %s1 = inlined_call_operand.hbm [shape: bf16[2048,256], index: 1, kind: input, shape index: {}]
  %s2 = inlined_call_operand.vmem [shape: f32[1,256], index: 2, kind: input, shape index: {}]
  %s3 = inlined_call_operand.hbm [shape: bf16[256,128], index: 3, kind: input, shape index: {}]
  %s4 = inlined_call_operand.vmem [shape: f32[1,128], index: 4, kind: input, shape index: {}]
  %s5 = inlined_call_operand.hbm [shape: bf16[128,128], index: 5, kind: input, shape index: {}]
  %s6 = inlined_call_operand.vmem [shape: f32[1,128], index: 6, kind: input, shape index: {}]
  %s7 = inlined_call_operand.hbm [shape: bf16[128,128], index: 7, kind: input, shape index: {}]
  %s8 = inlined_call_operand.vmem [shape: f32[1,128], index: 8, kind: input, shape index: {}]
  %s9 = inlined_call_operand.hbm [shape: bf16[128,128], index: 9, kind: input, shape index: {}]
  %s10 = inlined_call_operand.vmem [shape: f32[1,128], index: 10, kind: input, shape index: {}]
  %s11 = inlined_call_operand.hbm [shape: bf16[128,128], index: 11, kind: input, shape index: {}]
  %s12 = inlined_call_operand.vmem [shape: f32[1,128], index: 12, kind: input, shape index: {}]
  %s13 = inlined_call_operand.hbm [shape: bf16[128,128], index: 13, kind: input, shape index: {}]
  %s14 = inlined_call_operand.vmem [shape: f32[1,128], index: 14, kind: input, shape index: {}]
  %s15 = inlined_call_operand.hbm [shape: bf16[128,128], index: 15, kind: input, shape index: {}]
  %s16 = inlined_call_operand.vmem [shape: f32[1,128], index: 16, kind: input, shape index: {}]
  %s17 = inlined_call_operand.hbm [shape: f32[8,128], index: 17, kind: output, shape index: {}]
  %s18 = sld [smem:[#allocation0]]
  $region114: #{tpu_custom_call.1} parent=0
    _
  %s20 = ssub.s32 1, %s18
  %s21 = scalar_select 0, %s20, %s18
  $region1: #{tpu_custom_call.1} parent=0
    #allocation2 [shape = 'u8[32768]{0}', space=vmem, size = 0x8000, scoped, tag = 'input window, operand 0, single buffered']
    #allocation3 [shape = 's32[1]{0}', space=sflag, size = 0x4, scoped, tag = 'scoped memory for tpu_custom_call.1']
    #allocation4 [shape = 's32[1]{0}', space=sflag, size = 0x4, scoped, tag = 'scoped memory for tpu_custom_call.1']
    #allocation5 [shape = 'u8[1048576]{0}', space=vmem, size = 0x100000, scoped, tag = 'input window, operand 1, single buffered']
    #allocation6 [shape = 's32[1]{0}', space=sflag, size = 0x4, scoped, tag = 'scoped memory for tpu_custom_call.1']
    #allocation7 [shape = 'u8[65536]{0}', space=vmem, size = 0x10000, scoped, tag = 'input window, operand 3, single buffered']
    #allocation8 [shape = 'u8[32768]{0}', space=vmem, size = 0x8000, scoped, tag = 'input window, operand 5, single buffered']
    #allocation9 [shape = 's32[1]{0}', space=sflag, size = 0x4, scoped, tag = 'scoped memory for tpu_custom_call.1']
    #allocation10 [shape = 'u8[32768]{0}', space=vmem, size = 0x8000, scoped, tag = 'input window, operand 7, single buffered']
    #allocation11 [shape = 'u8[32768]{0}', space=vmem, size = 0x8000, scoped, tag = 'input window, operand 9, single buffered']
    #allocation12 [shape = 's32[1]{0}', space=sflag, size = 0x4, scoped, tag = 'scoped memory for tpu_custom_call.1']
    #allocation13 [shape = 'u8[32768]{0}', space=vmem, size = 0x8000, scoped, tag = 'input window, operand 11, single buffered']
    #allocation14 [shape = 'u8[32768]{0}', space=vmem, size = 0x8000, scoped, tag = 'input window, operand 13, single buffered']
    #allocation15 [shape = 's32[1]{0}', space=sflag, size = 0x4, scoped, tag = 'scoped memory for tpu_custom_call.1']
    #allocation16 [shape = 'u8[32768]{0}', space=vmem, size = 0x8000, scoped, tag = 'input window, operand 15, single buffered']
    #allocation17 [shape = 'u8[4096]{0}', space=vmem, size = 0x1000, scoped, tag = 'output window, operand 0, single buffered']
    %22 = vsyncpa [#allocation3], 0
    %23 = vsyncpa [#allocation6], 0
    %24 = vsyncpa [#allocation9], 0
    %25 = vsyncpa [#allocation12], 0
    %26 = vsyncpa [#allocation15], 0
    %27 = vsyncpa [#allocation4], 0
    // Predicated region
    $region2: #{tpu_custom_call.1} parent=1 // pred_check
      _
    $region3: #{tpu_custom_call.1} parent=1 // pred_check_branch
      %29 = sbr.rel (0) target = $region5
    $region4: #{tpu_custom_call.1} parent=1 // pred_region
      %s31 = ssub.s32 1024, 1024
      %32 = vsyncadd [#allocation3], %s31
      %s34 = sshll.u32 [#allocation2], 4
      %s35 = int_to_ptr.vmem [resolvable:$true] %s34
      %37 = dma.hbm_to_vmem [thread:$0]  %s0, 1024, %s35, [#allocation3]
    $region5: #{tpu_custom_call.1} parent=1 // pred_fallthru
      _
    // Predicated region
    $region6: #{tpu_custom_call.1} parent=1 // pred_check
      _
    $region7: #{tpu_custom_call.1} parent=1 // pred_check_branch
      %39 = sbr.rel (0) target = $region9
    $region8: #{tpu_custom_call.1} parent=1 // pred_region
      %s41 = ssub.s32 32768, 32768
      %42 = vsyncadd [#allocation6], %s41
      %s43 = sshll.u32 [#allocation5], 4
      %s44 = int_to_ptr.vmem [resolvable:$true] %s43
      %49 = dma.hbm_to_vmem [thread:$0]  %s1, 32768, %s44, [#allocation6], 128, 128, 8
    $region9: #{tpu_custom_call.1} parent=1 // pred_fallthru
      _
    // Predicated region
    $region10: #{tpu_custom_call.1} parent=1 // pred_check
      _
    $region11: #{tpu_custom_call.1} parent=1 // pred_check_branch
      %51 = sbr.rel (0) target = $region13
    $region12: #{tpu_custom_call.1} parent=1 // pred_region
      _
    $region13: #{tpu_custom_call.1} parent=1 // pred_fallthru
      _
    // Predicated region
    $region14: #{tpu_custom_call.1} parent=1 // pred_check
      _
    $region15: #{tpu_custom_call.1} parent=1 // pred_check_branch
      %53 = sbr.rel (0) target = $region17
    $region16: #{tpu_custom_call.1} parent=1 // pred_region
      %s55 = ssub.s32 2048, 2048
      %56 = vsyncadd [#allocation6], %s55
      %s57 = sshll.u32 [#allocation7], 4
      %s58 = int_to_ptr.vmem [resolvable:$true] %s57
      %63 = dma.hbm_to_vmem [thread:$0]  %s3, 2048, %s58, [#allocation6], 64, 64, 4
    $region17: #{tpu_custom_call.1} parent=1 // pred_fallthru
      _
    // Predicated region
    $region18: #{tpu_custom_call.1} parent=1 // pred_check
      _
    $region19: #{tpu_custom_call.1} parent=1 // pred_check_branch
      %65 = sbr.rel (0) target = $region21
    $region20: #{tpu_custom_call.1} parent=1 // pred_region
      _
    $region21: #{tpu_custom_call.1} parent=1 // pred_fallthru
      _
    // Predicated region
    $region22: #{tpu_custom_call.1} parent=1 // pred_check
      _
    $region23: #{tpu_custom_call.1} parent=1 // pred_check_branch
      %67 = sbr.rel (0) target = $region25
    $region24: #{tpu_custom_call.1} parent=1 // pred_region
      %s69 = ssub.s32 1024, 1024
      %70 = vsyncadd [#allocation9], %s69
      %s71 = sshll.u32 [#allocation8], 4
      %s72 = int_to_ptr.vmem [resolvable:$true] %s71
      %77 = dma.hbm_to_vmem [thread:$0]  %s5, 1024, %s72, [#allocation9], 64, 64, 4
    $region25: #{tpu_custom_call.1} parent=1 // pred_fallthru
      _
    // Predicated region
    $region26: #{tpu_custom_call.1} parent=1 // pred_check
      _
    $region27: #{tpu_custom_call.1} parent=1 // pred_check_branch
      %79 = sbr.rel (0) target = $region29
    $region28: #{tpu_custom_call.1} parent=1 // pred_region
      _
    $region29: #{tpu_custom_call.1} parent=1 // pred_fallthru
      _
    // Predicated region
    $region30: #{tpu_custom_call.1} parent=1 // pred_check
      _
    $region31: #{tpu_custom_call.1} parent=1 // pred_check_branch
      %81 = sbr.rel (0) target = $region33
    $region32: #{tpu_custom_call.1} parent=1 // pred_region
      %s83 = ssub.s32 1024, 1024
      %84 = vsyncadd [#allocation9], %s83
      %s85 = sshll.u32 [#allocation10], 4
      %s86 = int_to_ptr.vmem [resolvable:$true] %s85
      %91 = dma.hbm_to_vmem [thread:$0]  %s7, 1024, %s86, [#allocation9], 64, 64, 4
    $region33: #{tpu_custom_call.1} parent=1 // pred_fallthru
      _
    // Predicated region
    $region34: #{tpu_custom_call.1} parent=1 // pred_check
      _
    $region35: #{tpu_custom_call.1} parent=1 // pred_check_branch
      %93 = sbr.rel (0) target = $region37
    $region36: #{tpu_custom_call.1} parent=1 // pred_region
      _
    $region37: #{tpu_custom_call.1} parent=1 // pred_fallthru
      _
    // Predicated region
    $region38: #{tpu_custom_call.1} parent=1 // pred_check
      _
    $region39: #{tpu_custom_call.1} parent=1 // pred_check_branch
      %95 = sbr.rel (0) target = $region41
    $region40: #{tpu_custom_call.1} parent=1 // pred_region
      %s97 = ssub.s32 1024, 1024
      %98 = vsyncadd [#allocation12], %s97
      %s99 = sshll.u32 [#allocation11], 4
      %s100 = int_to_ptr.vmem [resolvable:$true] %s99
      %105 = dma.hbm_to_vmem [thread:$0]  %s9, 1024, %s100, [#allocation12], 64, 64, 4
    $region41: #{tpu_custom_call.1} parent=1 // pred_fallthru
      _
    // Predicated region
    $region42: #{tpu_custom_call.1} parent=1 // pred_check
      _
    $region43: #{tpu_custom_call.1} parent=1 // pred_check_branch
      %107 = sbr.rel (0) target = $region45
    $region44: #{tpu_custom_call.1} parent=1 // pred_region
      _
    $region45: #{tpu_custom_call.1} parent=1 // pred_fallthru
      _
    // Predicated region
    $region46: #{tpu_custom_call.1} parent=1 // pred_check
      _
    $region47: #{tpu_custom_call.1} parent=1 // pred_check_branch
      %109 = sbr.rel (0) target = $region49
    $region48: #{tpu_custom_call.1} parent=1 // pred_region
      %s111 = ssub.s32 1024, 1024
      %112 = vsyncadd [#allocation12], %s111
      %s113 = sshll.u32 [#allocation13], 4
      %s114 = int_to_ptr.vmem [resolvable:$true] %s113
      %119 = dma.hbm_to_vmem [thread:$0]  %s11, 1024, %s114, [#allocation12], 64, 64, 4
    $region49: #{tpu_custom_call.1} parent=1 // pred_fallthru
      _
    // Predicated region
    $region50: #{tpu_custom_call.1} parent=1 // pred_check
      _
    $region51: #{tpu_custom_call.1} parent=1 // pred_check_branch
      %121 = sbr.rel (0) target = $region53
    $region52: #{tpu_custom_call.1} parent=1 // pred_region
      _
    $region53: #{tpu_custom_call.1} parent=1 // pred_fallthru
      _
    // Predicated region
    $region54: #{tpu_custom_call.1} parent=1 // pred_check
      _
    $region55: #{tpu_custom_call.1} parent=1 // pred_check_branch
      %123 = sbr.rel (0) target = $region57
    $region56: #{tpu_custom_call.1} parent=1 // pred_region
      %s125 = ssub.s32 1024, 1024
      %126 = vsyncadd [#allocation15], %s125
      %s127 = sshll.u32 [#allocation14], 4
      %s128 = int_to_ptr.vmem [resolvable:$true] %s127
      %133 = dma.hbm_to_vmem [thread:$0]  %s13, 1024, %s128, [#allocation15], 64, 64, 4
    $region57: #{tpu_custom_call.1} parent=1 // pred_fallthru
      _
    // Predicated region
    $region58: #{tpu_custom_call.1} parent=1 // pred_check
      _
    $region59: #{tpu_custom_call.1} parent=1 // pred_check_branch
      %135 = sbr.rel (0) target = $region61
    $region60: #{tpu_custom_call.1} parent=1 // pred_region
      _
    $region61: #{tpu_custom_call.1} parent=1 // pred_fallthru
      _
    // Predicated region
    $region62: #{tpu_custom_call.1} parent=1 // pred_check
      _
    $region63: #{tpu_custom_call.1} parent=1 // pred_check_branch
      %137 = sbr.rel (0) target = $region65
    $region64: #{tpu_custom_call.1} parent=1 // pred_region
      %s139 = ssub.s32 1024, 1024
      %140 = vsyncadd [#allocation15], %s139
      %s141 = sshll.u32 [#allocation16], 4
      %s142 = int_to_ptr.vmem [resolvable:$true] %s141
      %147 = dma.hbm_to_vmem [thread:$0]  %s15, 1024, %s142, [#allocation15], 64, 64, 4
    $region65: #{tpu_custom_call.1} parent=1 // pred_fallthru
      _
    // Predicated region
    $region66: #{tpu_custom_call.1} parent=1 // pred_check
      _
    $region67: #{tpu_custom_call.1} parent=1 // pred_check_branch
      %149 = sbr.rel (0) target = $region69
    $region68: #{tpu_custom_call.1} parent=1 // pred_region
      _
    $region69: #{tpu_custom_call.1} parent=1 // pred_fallthru
      _
    // Predicated region
    $region70: #{tpu_custom_call.1} parent=1 // pred_check
      _
    $region71: #{tpu_custom_call.1} parent=1 // pred_check_branch
      %151 = sbr.rel (0) target = $region73
    $region72: #{tpu_custom_call.1} parent=1 // pred_region
      %152 = dma.done [#allocation3], 1024
    $region73: #{tpu_custom_call.1} parent=1 // pred_fallthru
      _
    // Predicated region
    $region74: #{tpu_custom_call.1} parent=1 // pred_check
      _
    $region75: #{tpu_custom_call.1} parent=1 // pred_check_branch
      %154 = sbr.rel (0) target = $region77
    $region76: #{tpu_custom_call.1} parent=1 // pred_region
      %155 = dma.done [#allocation6], 32768
    $region77: #{tpu_custom_call.1} parent=1 // pred_fallthru
      _
    // Predicated region
    $region78: #{tpu_custom_call.1} parent=1 // pred_check
      _
    $region79: #{tpu_custom_call.1} parent=1 // pred_check_branch
      %157 = sbr.rel (0) target = $region81
    $region80: #{tpu_custom_call.1} parent=1 // pred_region
      %158 = dma.done [#allocation6], 2048
    $region81: #{tpu_custom_call.1} parent=1 // pred_fallthru
      _
    // Predicated region
    $region82: #{tpu_custom_call.1} parent=1 // pred_check
      _
    $region83: #{tpu_custom_call.1} parent=1 // pred_check_branch
      %160 = sbr.rel (0) target = $region85
    $region84: #{tpu_custom_call.1} parent=1 // pred_region
      %161 = dma.done [#allocation9], 1024
    $region85: #{tpu_custom_call.1} parent=1 // pred_fallthru
      _
    // Predicated region
    $region86: #{tpu_custom_call.1} parent=1 // pred_check
      _
    $region87: #{tpu_custom_call.1} parent=1 // pred_check_branch
      %163 = sbr.rel (0) target = $region89
    $region88: #{tpu_custom_call.1} parent=1 // pred_region
      %164 = dma.done [#allocation9], 1024
    $region89: #{tpu_custom_call.1} parent=1 // pred_fallthru
      _
    // Predicated region
    $region90: #{tpu_custom_call.1} parent=1 // pred_check
      _
    $region91: #{tpu_custom_call.1} parent=1 // pred_check_branch
      %166 = sbr.rel (0) target = $region93
    $region92: #{tpu_custom_call.1} parent=1 // pred_region
      %167 = dma.done [#allocation12], 1024
    $region93: #{tpu_custom_call.1} parent=1 // pred_fallthru
      _
    // Predicated region
    $region94: #{tpu_custom_call.1} parent=1 // pred_check
      _
    $region95: #{tpu_custom_call.1} parent=1 // pred_check_branch
      %169 = sbr.rel (0) target = $region97
    $region96: #{tpu_custom_call.1} parent=1 // pred_region
      %170 = dma.done [#allocation12], 1024
    $region97: #{tpu_custom_call.1} parent=1 // pred_fallthru
      _
    // Predicated region
    $region98: #{tpu_custom_call.1} parent=1 // pred_check
      _
    $region99: #{tpu_custom_call.1} parent=1 // pred_check_branch
      %172 = sbr.rel (0) target = $region101
    $region100: #{tpu_custom_call.1} parent=1 // pred_region
      %173 = dma.done [#allocation15], 1024
    $region101: #{tpu_custom_call.1} parent=1 // pred_fallthru
      _
    // Predicated region
    $region102: #{tpu_custom_call.1} parent=1 // pred_check
      _
    $region103: #{tpu_custom_call.1} parent=1 // pred_check_branch
      %175 = sbr.rel (0) target = $region105
    $region104: #{tpu_custom_call.1} parent=1 // pred_region
      %176 = dma.done [#allocation15], 1024
    $region105: #{tpu_custom_call.1} parent=1 // pred_fallthru
      _
    %v178 = vld [vmem:[#allocation2] sm:$0xff]
    %v179 = vld [vmem:[#allocation2 + $0x8] sm:$0xff]
    %v180 = vld [vmem:[#allocation2 + $0x10] sm:$0xff]
    %v181 = vld [vmem:[#allocation2 + $0x18] sm:$0xff]
    %v182 = vld [vmem:[#allocation2 + $0x20] sm:$0xff]
    %v183 = vld [vmem:[#allocation2 + $0x28] sm:$0xff]
    %v184 = vld [vmem:[#allocation2 + $0x30] sm:$0xff]
    %v185 = vld [vmem:[#allocation2 + $0x38] sm:$0xff]
    %v186 = vld [vmem:[#allocation5] sm:$0xff]
    %v187 = vld [vmem:[#allocation5 + $0x8] sm:$0xff]
    %v188 = vld [vmem:[#allocation5 + $0x10] sm:$0xff]
    %v189 = vld [vmem:[#allocation5 + $0x18] sm:$0xff]
    %v190 = vld [vmem:[#allocation5 + $0x20] sm:$0xff]
    %v191 = vld [vmem:[#allocation5 + $0x28] sm:$0xff]
    %v192 = vld [vmem:[#allocation5 + $0x30] sm:$0xff]
    %v193 = vld [vmem:[#allocation5 + $0x38] sm:$0xff]
    %v194 = vld [vmem:[#allocation5 + $0x40] sm:$0xff]
    %v195 = vld [vmem:[#allocation5 + $0x48] sm:$0xff]
    %v196 = vld [vmem:[#allocation5 + $0x50] sm:$0xff]
    %v197 = vld [vmem:[#allocation5 + $0x58] sm:$0xff]
    %v198 = vld [vmem:[#allocation5 + $0x60] sm:$0xff]
    %v199 = vld [vmem:[#allocation5 + $0x68] sm:$0xff]
    %v200 = vld [vmem:[#allocation5 + $0x70] sm:$0xff]
    %v201 = vld [vmem:[#allocation5 + $0x78] sm:$0xff]
    %v202 = vld [vmem:[#allocation5 + $0x80] sm:$0xff]
    %v203 = vld [vmem:[#allocation5 + $0x88] sm:$0xff]
    %v204 = vld [vmem:[#allocation5 + $0x90] sm:$0xff]
    %v205 = vld [vmem:[#allocation5 + $0x98] sm:$0xff]
    %v206 = vld [vmem:[#allocation5 + $0xa0] sm:$0xff]
    %v207 = vld [vmem:[#allocation5 + $0xa8] sm:$0xff]
    %v208 = vld [vmem:[#allocation5 + $0xb0] sm:$0xff]
    %v209 = vld [vmem:[#allocation5 + $0xb8] sm:$0xff]
    %v210 = vld [vmem:[#allocation5 + $0xc0] sm:$0xff]
    %v211 = vld [vmem:[#allocation5 + $0xc8] sm:$0xff]
    %v212 = vld [vmem:[#allocation5 + $0xd0] sm:$0xff]
    %v213 = vld [vmem:[#allocation5 + $0xd8] sm:$0xff]
    %v214 = vld [vmem:[#allocation5 + $0xe0] sm:$0xff]
    %v215 = vld [vmem:[#allocation5 + $0xe8] sm:$0xff]
    %v216 = vld [vmem:[#allocation5 + $0xf0] sm:$0xff]
    %v217 = vld [vmem:[#allocation5 + $0xf8] sm:$0xff]
    %v218 = vld [vmem:[#allocation5 + $0x100] sm:$0xff]
    %v219 = vld [vmem:[#allocation5 + $0x108] sm:$0xff]
    %v220 = vld [vmem:[#allocation5 + $0x110] sm:$0xff]
    %v221 = vld [vmem:[#allocation5 + $0x118] sm:$0xff]
    %v222 = vld [vmem:[#allocation5 + $0x120] sm:$0xff]
    %v223 = vld [vmem:[#allocation5 + $0x128] sm:$0xff]
    %v224 = vld [vmem:[#allocation5 + $0x130] sm:$0xff]
    %v225 = vld [vmem:[#allocation5 + $0x138] sm:$0xff]
    %v226 = vld [vmem:[#allocation5 + $0x140] sm:$0xff]
    %v227 = vld [vmem:[#allocation5 + $0x148] sm:$0xff]
    %v228 = vld [vmem:[#allocation5 + $0x150] sm:$0xff]
    %v229 = vld [vmem:[#allocation5 + $0x158] sm:$0xff]
    %v230 = vld [vmem:[#allocation5 + $0x160] sm:$0xff]
    %v231 = vld [vmem:[#allocation5 + $0x168] sm:$0xff]
    %v232 = vld [vmem:[#allocation5 + $0x170] sm:$0xff]
    %v233 = vld [vmem:[#allocation5 + $0x178] sm:$0xff]
    %v234 = vld [vmem:[#allocation5 + $0x180] sm:$0xff]
    %v235 = vld [vmem:[#allocation5 + $0x188] sm:$0xff]
    %v236 = vld [vmem:[#allocation5 + $0x190] sm:$0xff]
    %v237 = vld [vmem:[#allocation5 + $0x198] sm:$0xff]
    %v238 = vld [vmem:[#allocation5 + $0x1a0] sm:$0xff]
    %v239 = vld [vmem:[#allocation5 + $0x1a8] sm:$0xff]
    %v240 = vld [vmem:[#allocation5 + $0x1b0] sm:$0xff]
    %v241 = vld [vmem:[#allocation5 + $0x1b8] sm:$0xff]
    %v242 = vld [vmem:[#allocation5 + $0x1c0] sm:$0xff]
    %v243 = vld [vmem:[#allocation5 + $0x1c8] sm:$0xff]
    %v244 = vld [vmem:[#allocation5 + $0x1d0] sm:$0xff]
    %v245 = vld [vmem:[#allocation5 + $0x1d8] sm:$0xff]
    %v246 = vld [vmem:[#allocation5 + $0x1e0] sm:$0xff]
    %v247 = vld [vmem:[#allocation5 + $0x1e8] sm:$0xff]
    %v248 = vld [vmem:[#allocation5 + $0x1f0] sm:$0xff]
    %v249 = vld [vmem:[#allocation5 + $0x1f8] sm:$0xff]
    %v250 = vld [vmem:[#allocation5 + $0x200] sm:$0xff]
    %v251 = vld [vmem:[#allocation5 + $0x208] sm:$0xff]
    %v252 = vld [vmem:[#allocation5 + $0x210] sm:$0xff]
    %v253 = vld [vmem:[#allocation5 + $0x218] sm:$0xff]
    %v254 = vld [vmem:[#allocation5 + $0x220] sm:$0xff]
    %v255 = vld [vmem:[#allocation5 + $0x228] sm:$0xff]
    %v256 = vld [vmem:[#allocation5 + $0x230] sm:$0xff]
    %v257 = vld [vmem:[#allocation5 + $0x238] sm:$0xff]
    %v258 = vld [vmem:[#allocation5 + $0x240] sm:$0xff]
    %v259 = vld [vmem:[#allocation5 + $0x248] sm:$0xff]
    %v260 = vld [vmem:[#allocation5 + $0x250] sm:$0xff]
    %v261 = vld [vmem:[#allocation5 + $0x258] sm:$0xff]
    %v262 = vld [vmem:[#allocation5 + $0x260] sm:$0xff]
    %v263 = vld [vmem:[#allocation5 + $0x268] sm:$0xff]
    %v264 = vld [vmem:[#allocation5 + $0x270] sm:$0xff]
    %v265 = vld [vmem:[#allocation5 + $0x278] sm:$0xff]
    %v266 = vld [vmem:[#allocation5 + $0x280] sm:$0xff]
    %v267 = vld [vmem:[#allocation5 + $0x288] sm:$0xff]
    %v268 = vld [vmem:[#allocation5 + $0x290] sm:$0xff]
    %v269 = vld [vmem:[#allocation5 + $0x298] sm:$0xff]
    %v270 = vld [vmem:[#allocation5 + $0x2a0] sm:$0xff]
    %v271 = vld [vmem:[#allocation5 + $0x2a8] sm:$0xff]
    %v272 = vld [vmem:[#allocation5 + $0x2b0] sm:$0xff]
    %v273 = vld [vmem:[#allocation5 + $0x2b8] sm:$0xff]
    %v274 = vld [vmem:[#allocation5 + $0x2c0] sm:$0xff]
    %v275 = vld [vmem:[#allocation5 + $0x2c8] sm:$0xff]
    %v276 = vld [vmem:[#allocation5 + $0x2d0] sm:$0xff]
    %v277 = vld [vmem:[#allocation5 + $0x2d8] sm:$0xff]
    %v278 = vld [vmem:[#allocation5 + $0x2e0] sm:$0xff]
    %v279 = vld [vmem:[#allocation5 + $0x2e8] sm:$0xff]
    %v280 = vld [vmem:[#allocation5 + $0x2f0] sm:$0xff]
    %v281 = vld [vmem:[#allocation5 + $0x2f8] sm:$0xff]
    %v282 = vld [vmem:[#allocation5 + $0x300] sm:$0xff]
    %v283 = vld [vmem:[#allocation5 + $0x308] sm:$0xff]
    %v284 = vld [vmem:[#allocation5 + $0x310] sm:$0xff]
    %v285 = vld [vmem:[#allocation5 + $0x318] sm:$0xff]
    %v286 = vld [vmem:[#allocation5 + $0x320] sm:$0xff]
    %v287 = vld [vmem:[#allocation5 + $0x328] sm:$0xff]
    %v288 = vld [vmem:[#allocation5 + $0x330] sm:$0xff]
    %v289 = vld [vmem:[#allocation5 + $0x338] sm:$0xff]
    %v290 = vld [vmem:[#allocation5 + $0x340] sm:$0xff]
    %v291 = vld [vmem:[#allocation5 + $0x348] sm:$0xff]
    %v292 = vld [vmem:[#allocation5 + $0x350] sm:$0xff]
    %v293 = vld [vmem:[#allocation5 + $0x358] sm:$0xff]
    %v294 = vld [vmem:[#allocation5 + $0x360] sm:$0xff]
    %v295 = vld [vmem:[#allocation5 + $0x368] sm:$0xff]
    %v296 = vld [vmem:[#allocation5 + $0x370] sm:$0xff]
    %v297 = vld [vmem:[#allocation5 + $0x378] sm:$0xff]
    %v298 = vld [vmem:[#allocation5 + $0x380] sm:$0xff]
    %v299 = vld [vmem:[#allocation5 + $0x388] sm:$0xff]
    %v300 = vld [vmem:[#allocation5 + $0x390] sm:$0xff]
    %v301 = vld [vmem:[#allocation5 + $0x398] sm:$0xff]
    %v302 = vld [vmem:[#allocation5 + $0x3a0] sm:$0xff]
    %v303 = vld [vmem:[#allocation5 + $0x3a8] sm:$0xff]
    %v304 = vld [vmem:[#allocation5 + $0x3b0] sm:$0xff]
    %v305 = vld [vmem:[#allocation5 + $0x3b8] sm:$0xff]
    %v306 = vld [vmem:[#allocation5 + $0x3c0] sm:$0xff]
    %v307 = vld [vmem:[#allocation5 + $0x3c8] sm:$0xff]
    %v308 = vld [vmem:[#allocation5 + $0x3d0] sm:$0xff]
    %v309 = vld [vmem:[#allocation5 + $0x3d8] sm:$0xff]
    %v310 = vld [vmem:[#allocation5 + $0x3e0] sm:$0xff]
    %v311 = vld [vmem:[#allocation5 + $0x3e8] sm:$0xff]
    %v312 = vld [vmem:[#allocation5 + $0x3f0] sm:$0xff]
    %v313 = vld [vmem:[#allocation5 + $0x3f8] sm:$0xff]
    %v314 = vld [vmem:[#allocation5 + $0x400] sm:$0xff]
    %v315 = vld [vmem:[#allocation5 + $0x408] sm:$0xff]
    %v316 = vld [vmem:[#allocation5 + $0x410] sm:$0xff]
    %v317 = vld [vmem:[#allocation5 + $0x418] sm:$0xff]
    %v318 = vld [vmem:[#allocation5 + $0x420] sm:$0xff]
    %v319 = vld [vmem:[#allocation5 + $0x428] sm:$0xff]
    %v320 = vld [vmem:[#allocation5 + $0x430] sm:$0xff]
    %v321 = vld [vmem:[#allocation5 + $0x438] sm:$0xff]
    %v322 = vld [vmem:[#allocation5 + $0x440] sm:$0xff]
    %v323 = vld [vmem:[#allocation5 + $0x448] sm:$0xff]
    %v324 = vld [vmem:[#allocation5 + $0x450] sm:$0xff]
    %v325 = vld [vmem:[#allocation5 + $0x458] sm:$0xff]
    %v326 = vld [vmem:[#allocation5 + $0x460] sm:$0xff]
    %v327 = vld [vmem:[#allocation5 + $0x468] sm:$0xff]
    %v328 = vld [vmem:[#allocation5 + $0x470] sm:$0xff]
    %v329 = vld [vmem:[#allocation5 + $0x478] sm:$0xff]
    %v330 = vld [vmem:[#allocation5 + $0x480] sm:$0xff]
    %v331 = vld [vmem:[#allocation5 + $0x488] sm:$0xff]
    %v332 = vld [vmem:[#allocation5 + $0x490] sm:$0xff]
    %v333 = vld [vmem:[#allocation5 + $0x498] sm:$0xff]
    %v334 = vld [vmem:[#allocation5 + $0x4a0] sm:$0xff]
    %v335 = vld [vmem:[#allocation5 + $0x4a8] sm:$0xff]
    %v336 = vld [vmem:[#allocation5 + $0x4b0] sm:$0xff]
    %v337 = vld [vmem:[#allocation5 + $0x4b8] sm:$0xff]
    %v338 = vld [vmem:[#allocation5 + $0x4c0] sm:$0xff]
    %v339 = vld [vmem:[#allocation5 + $0x4c8] sm:$0xff]
    %v340 = vld [vmem:[#allocation5 + $0x4d0] sm:$0xff]
    %v341 = vld [vmem:[#allocation5 + $0x4d8] sm:$0xff]
    %v342 = vld [vmem:[#allocation5 + $0x4e0] sm:$0xff]
    %v343 = vld [vmem:[#allocation5 + $0x4e8] sm:$0xff]
    %v344 = vld [vmem:[#allocation5 + $0x4f0] sm:$0xff]
    %v345 = vld [vmem:[#allocation5 + $0x4f8] sm:$0xff]
    %v346 = vld [vmem:[#allocation5 + $0x500] sm:$0xff]
    %v347 = vld [vmem:[#allocation5 + $0x508] sm:$0xff]
    %v348 = vld [vmem:[#allocation5 + $0x510] sm:$0xff]
    %v349 = vld [vmem:[#allocation5 + $0x518] sm:$0xff]
    %v350 = vld [vmem:[#allocation5 + $0x520] sm:$0xff]
    %v351 = vld [vmem:[#allocation5 + $0x528] sm:$0xff]
    %v352 = vld [vmem:[#allocation5 + $0x530] sm:$0xff]
    %v353 = vld [vmem:[#allocation5 + $0x538] sm:$0xff]
    %v354 = vld [vmem:[#allocation5 + $0x540] sm:$0xff]
    %v355 = vld [vmem:[#allocation5 + $0x548] sm:$0xff]
    %v356 = vld [vmem:[#allocation5 + $0x550] sm:$0xff]
    %v357 = vld [vmem:[#allocation5 + $0x558] sm:$0xff]
    %v358 = vld [vmem:[#allocation5 + $0x560] sm:$0xff]
    %v359 = vld [vmem:[#allocation5 + $0x568] sm:$0xff]
    %v360 = vld [vmem:[#allocation5 + $0x570] sm:$0xff]
    %v361 = vld [vmem:[#allocation5 + $0x578] sm:$0xff]
    %v362 = vld [vmem:[#allocation5 + $0x580] sm:$0xff]
    %v363 = vld [vmem:[#allocation5 + $0x588] sm:$0xff]
    %v364 = vld [vmem:[#allocation5 + $0x590] sm:$0xff]
    %v365 = vld [vmem:[#allocation5 + $0x598] sm:$0xff]
    %v366 = vld [vmem:[#allocation5 + $0x5a0] sm:$0xff]
    %v367 = vld [vmem:[#allocation5 + $0x5a8] sm:$0xff]
    %v368 = vld [vmem:[#allocation5 + $0x5b0] sm:$0xff]
    %v369 = vld [vmem:[#allocation5 + $0x5b8] sm:$0xff]
    %v370 = vld [vmem:[#allocation5 + $0x5c0] sm:$0xff]
    %v371 = vld [vmem:[#allocation5 + $0x5c8] sm:$0xff]
    %v372 = vld [vmem:[#allocation5 + $0x5d0] sm:$0xff]
    %v373 = vld [vmem:[#allocation5 + $0x5d8] sm:$0xff]
    %v374 = vld [vmem:[#allocation5 + $0x5e0] sm:$0xff]
    %v375 = vld [vmem:[#allocation5 + $0x5e8] sm:$0xff]
    %v376 = vld [vmem:[#allocation5 + $0x5f0] sm:$0xff]
    %v377 = vld [vmem:[#allocation5 + $0x5f8] sm:$0xff]
    %v378 = vld [vmem:[#allocation5 + $0x600] sm:$0xff]
    %v379 = vld [vmem:[#allocation5 + $0x608] sm:$0xff]
    %v380 = vld [vmem:[#allocation5 + $0x610] sm:$0xff]
    %v381 = vld [vmem:[#allocation5 + $0x618] sm:$0xff]
    %v382 = vld [vmem:[#allocation5 + $0x620] sm:$0xff]
    %v383 = vld [vmem:[#allocation5 + $0x628] sm:$0xff]
    %v384 = vld [vmem:[#allocation5 + $0x630] sm:$0xff]
    %v385 = vld [vmem:[#allocation5 + $0x638] sm:$0xff]
    %v386 = vld [vmem:[#allocation5 + $0x640] sm:$0xff]
    %v387 = vld [vmem:[#allocation5 + $0x648] sm:$0xff]
    %v388 = vld [vmem:[#allocation5 + $0x650] sm:$0xff]
    %v389 = vld [vmem:[#allocation5 + $0x658] sm:$0xff]
    %v390 = vld [vmem:[#allocation5 + $0x660] sm:$0xff]
    %v391 = vld [vmem:[#allocation5 + $0x668] sm:$0xff]
    %v392 = vld [vmem:[#allocation5 + $0x670] sm:$0xff]
    %v393 = vld [vmem:[#allocation5 + $0x678] sm:$0xff]
    %v394 = vld [vmem:[#allocation5 + $0x680] sm:$0xff]
    %v395 = vld [vmem:[#allocation5 + $0x688] sm:$0xff]
    %v396 = vld [vmem:[#allocation5 + $0x690] sm:$0xff]
    %v397 = vld [vmem:[#allocation5 + $0x698] sm:$0xff]
    %v398 = vld [vmem:[#allocation5 + $0x6a0] sm:$0xff]
    %v399 = vld [vmem:[#allocation5 + $0x6a8] sm:$0xff]
    %v400 = vld [vmem:[#allocation5 + $0x6b0] sm:$0xff]
    %v401 = vld [vmem:[#allocation5 + $0x6b8] sm:$0xff]
    %v402 = vld [vmem:[#allocation5 + $0x6c0] sm:$0xff]
    %v403 = vld [vmem:[#allocation5 + $0x6c8] sm:$0xff]
    %v404 = vld [vmem:[#allocation5 + $0x6d0] sm:$0xff]
    %v405 = vld [vmem:[#allocation5 + $0x6d8] sm:$0xff]
    %v406 = vld [vmem:[#allocation5 + $0x6e0] sm:$0xff]
    %v407 = vld [vmem:[#allocation5 + $0x6e8] sm:$0xff]
    %v408 = vld [vmem:[#allocation5 + $0x6f0] sm:$0xff]
    %v409 = vld [vmem:[#allocation5 + $0x6f8] sm:$0xff]
    %v410 = vld [vmem:[#allocation5 + $0x700] sm:$0xff]
    %v411 = vld [vmem:[#allocation5 + $0x708] sm:$0xff]
    %v412 = vld [vmem:[#allocation5 + $0x710] sm:$0xff]
    %v413 = vld [vmem:[#allocation5 + $0x718] sm:$0xff]
    %v414 = vld [vmem:[#allocation5 + $0x720] sm:$0xff]
    %v415 = vld [vmem:[#allocation5 + $0x728] sm:$0xff]
    %v416 = vld [vmem:[#allocation5 + $0x730] sm:$0xff]
    %v417 = vld [vmem:[#allocation5 + $0x738] sm:$0xff]
    %v418 = vld [vmem:[#allocation5 + $0x740] sm:$0xff]
    %v419 = vld [vmem:[#allocation5 + $0x748] sm:$0xff]
    %v420 = vld [vmem:[#allocation5 + $0x750] sm:$0xff]
    %v421 = vld [vmem:[#allocation5 + $0x758] sm:$0xff]
    %v422 = vld [vmem:[#allocation5 + $0x760] sm:$0xff]
    %v423 = vld [vmem:[#allocation5 + $0x768] sm:$0xff]
    %v424 = vld [vmem:[#allocation5 + $0x770] sm:$0xff]
    %v425 = vld [vmem:[#allocation5 + $0x778] sm:$0xff]
    %v426 = vld [vmem:[#allocation5 + $0x780] sm:$0xff]
    %v427 = vld [vmem:[#allocation5 + $0x788] sm:$0xff]
    %v428 = vld [vmem:[#allocation5 + $0x790] sm:$0xff]
    %v429 = vld [vmem:[#allocation5 + $0x798] sm:$0xff]
    %v430 = vld [vmem:[#allocation5 + $0x7a0] sm:$0xff]
    %v431 = vld [vmem:[#allocation5 + $0x7a8] sm:$0xff]
    %v432 = vld [vmem:[#allocation5 + $0x7b0] sm:$0xff]
    %v433 = vld [vmem:[#allocation5 + $0x7b8] sm:$0xff]
    %v434 = vld [vmem:[#allocation5 + $0x7c0] sm:$0xff]
    %v435 = vld [vmem:[#allocation5 + $0x7c8] sm:$0xff]
    %v436 = vld [vmem:[#allocation5 + $0x7d0] sm:$0xff]
    %v437 = vld [vmem:[#allocation5 + $0x7d8] sm:$0xff]
    %v438 = vld [vmem:[#allocation5 + $0x7e0] sm:$0xff]
    %v439 = vld [vmem:[#allocation5 + $0x7e8] sm:$0xff]
    %v440 = vld [vmem:[#allocation5 + $0x7f0] sm:$0xff]
    %v441 = vld [vmem:[#allocation5 + $0x7f8] sm:$0xff]
    %v442 = vld [vmem:[%s2] sm:$0x3]
    %v444 = vlaneseq
    %v445 = vshrl.u32 %v444, 7
    %v446 = vsub.s32 0, %v445
    %v447 = vrot.slane %v442, %v446
    %v448 = vlaneseq
    %v449 = vshrl.u32 %v448, 7
    %v450 = vsub.s32 1, %v449
    %v451 = vrot.slane %v442, %v450
    %v462 = vunpack.c.l.b16 %v178
    %v463 = vunpack.c.h.b16 %v178
    %v464 = vunpack.c.l.b16 %v179
    %v465 = vunpack.c.h.b16 %v179
    %v466 = vunpack.c.l.b16 %v180
    %v467 = vunpack.c.h.b16 %v180
    %v468 = vunpack.c.l.b16 %v181
    %v469 = vunpack.c.h.b16 %v181
    %v470 = vunpack.c.l.b16 %v182
    %v471 = vunpack.c.h.b16 %v182
    %v472 = vunpack.c.l.b16 %v183
    %v473 = vunpack.c.h.b16 %v183
    %v474 = vunpack.c.l.b16 %v184
    %v475 = vunpack.c.h.b16 %v184
    %v476 = vunpack.c.l.b16 %v185
    %v477 = vunpack.c.h.b16 %v185
    %v478 = vpack.c.b16 %v462, %v462
    %v479 = vpack.c.b16 %v463, %v463
    %v480 = vpack.c.b16 %v464, %v464
    %v481 = vpack.c.b16 %v465, %v465
    %v482 = vpack.c.b16 %v466, %v466
    %v483 = vpack.c.b16 %v467, %v467
    %v484 = vpack.c.b16 %v468, %v468
    %v485 = vpack.c.b16 %v469, %v469
    %v486 = vpack.c.b16 %v470, %v470
    %v487 = vpack.c.b16 %v471, %v471
    %v488 = vpack.c.b16 %v472, %v472
    %v489 = vpack.c.b16 %v473, %v473
    %v490 = vpack.c.b16 %v474, %v474
    %v491 = vpack.c.b16 %v475, %v475
    %v492 = vpack.c.b16 %v476, %v476
    %v493 = vpack.c.b16 %v477, %v477
    %v766 = vunpack.c.l.b16 %v186
    %v767 = vunpack.c.h.b16 %v186
    %v768 = vunpack.c.l.b16 %v187
    %v769 = vunpack.c.h.b16 %v187
    %v770 = vunpack.c.l.b16 %v188
    %v771 = vunpack.c.h.b16 %v188
    %v772 = vunpack.c.l.b16 %v189
    %v773 = vunpack.c.h.b16 %v189
    %v774 = vunpack.c.l.b16 %v190
    %v775 = vunpack.c.h.b16 %v190
    %v776 = vunpack.c.l.b16 %v191
    %v777 = vunpack.c.h.b16 %v191
    %v778 = vunpack.c.l.b16 %v192
    %v779 = vunpack.c.h.b16 %v192
    %v780 = vunpack.c.l.b16 %v193
    %v781 = vunpack.c.h.b16 %v193
    %v782 = vunpack.c.l.b16 %v194
    %v783 = vunpack.c.h.b16 %v194
    %v784 = vunpack.c.l.b16 %v195
    %v785 = vunpack.c.h.b16 %v195
    %v786 = vunpack.c.l.b16 %v196
    %v787 = vunpack.c.h.b16 %v196
    %v788 = vunpack.c.l.b16 %v197
    %v789 = vunpack.c.h.b16 %v197
    %v790 = vunpack.c.l.b16 %v198
    %v791 = vunpack.c.h.b16 %v198
    %v792 = vunpack.c.l.b16 %v199
    %v793 = vunpack.c.h.b16 %v199
    %v794 = vunpack.c.l.b16 %v200
    %v795 = vunpack.c.h.b16 %v200
    %v796 = vunpack.c.l.b16 %v201
    %v797 = vunpack.c.h.b16 %v201
    %v798 = vunpack.c.l.b16 %v202
    %v799 = vunpack.c.h.b16 %v202
    %v800 = vunpack.c.l.b16 %v203
    %v801 = vunpack.c.h.b16 %v203
    %v802 = vunpack.c.l.b16 %v204
    %v803 = vunpack.c.h.b16 %v204
    %v804 = vunpack.c.l.b16 %v205
    %v805 = vunpack.c.h.b16 %v205
    %v806 = vunpack.c.l.b16 %v206
    %v807 = vunpack.c.h.b16 %v206
    %v808 = vunpack.c.l.b16 %v207
    %v809 = vunpack.c.h.b16 %v207
    %v810 = vunpack.c.l.b16 %v208
    %v811 = vunpack.c.h.b16 %v208
    %v812 = vunpack.c.l.b16 %v209
    %v813 = vunpack.c.h.b16 %v209
    %v814 = vunpack.c.l.b16 %v210
    %v815 = vunpack.c.h.b16 %v210
    %v816 = vunpack.c.l.b16 %v211
    %v817 = vunpack.c.h.b16 %v211
    %v818 = vunpack.c.l.b16 %v212
    %v819 = vunpack.c.h.b16 %v212
    %v820 = vunpack.c.l.b16 %v213
    %v821 = vunpack.c.h.b16 %v213
    %v822 = vunpack.c.l.b16 %v214
    %v823 = vunpack.c.h.b16 %v214
    %v824 = vunpack.c.l.b16 %v215
    %v825 = vunpack.c.h.b16 %v215
    %v826 = vunpack.c.l.b16 %v216
    %v827 = vunpack.c.h.b16 %v216
    %v828 = vunpack.c.l.b16 %v217
    %v829 = vunpack.c.h.b16 %v217
    %v830 = vunpack.c.l.b16 %v218
    %v831 = vunpack.c.h.b16 %v218
    %v832 = vunpack.c.l.b16 %v219
    %v833 = vunpack.c.h.b16 %v219
    %v834 = vunpack.c.l.b16 %v220
    %v835 = vunpack.c.h.b16 %v220
    %v836 = vunpack.c.l.b16 %v221
    %v837 = vunpack.c.h.b16 %v221
    %v838 = vunpack.c.l.b16 %v222
    %v839 = vunpack.c.h.b16 %v222
    %v840 = vunpack.c.l.b16 %v223
    %v841 = vunpack.c.h.b16 %v223
    %v842 = vunpack.c.l.b16 %v224
    %v843 = vunpack.c.h.b16 %v224
    %v844 = vunpack.c.l.b16 %v225
    %v845 = vunpack.c.h.b16 %v225
    %v846 = vunpack.c.l.b16 %v226
    %v847 = vunpack.c.h.b16 %v226
    %v848 = vunpack.c.l.b16 %v227
    %v849 = vunpack.c.h.b16 %v227
    %v850 = vunpack.c.l.b16 %v228
    %v851 = vunpack.c.h.b16 %v228
    %v852 = vunpack.c.l.b16 %v229
    %v853 = vunpack.c.h.b16 %v229
    %v854 = vunpack.c.l.b16 %v230
    %v855 = vunpack.c.h.b16 %v230
    %v856 = vunpack.c.l.b16 %v231
    %v857 = vunpack.c.h.b16 %v231
    %v858 = vunpack.c.l.b16 %v232
    %v859 = vunpack.c.h.b16 %v232
    %v860 = vunpack.c.l.b16 %v233
    %v861 = vunpack.c.h.b16 %v233
    %v862 = vunpack.c.l.b16 %v234
    %v863 = vunpack.c.h.b16 %v234
    %v864 = vunpack.c.l.b16 %v235
    %v865 = vunpack.c.h.b16 %v235
    %v866 = vunpack.c.l.b16 %v236
    %v867 = vunpack.c.h.b16 %v236
    %v868 = vunpack.c.l.b16 %v237
    %v869 = vunpack.c.h.b16 %v237
    %v870 = vunpack.c.l.b16 %v238
    %v871 = vunpack.c.h.b16 %v238
    %v872 = vunpack.c.l.b16 %v239
    %v873 = vunpack.c.h.b16 %v239
    %v874 = vunpack.c.l.b16 %v240
    %v875 = vunpack.c.h.b16 %v240
    %v876 = vunpack.c.l.b16 %v241
    %v877 = vunpack.c.h.b16 %v241
    %v878 = vunpack.c.l.b16 %v242
    %v879 = vunpack.c.h.b16 %v242
    %v880 = vunpack.c.l.b16 %v243
    %v881 = vunpack.c.h.b16 %v243
    %v882 = vunpack.c.l.b16 %v244
    %v883 = vunpack.c.h.b16 %v244
    %v884 = vunpack.c.l.b16 %v245
    %v885 = vunpack.c.h.b16 %v245
    %v886 = vunpack.c.l.b16 %v246
    %v887 = vunpack.c.h.b16 %v246
    %v888 = vunpack.c.l.b16 %v247
    %v889 = vunpack.c.h.b16 %v247
    %v890 = vunpack.c.l.b16 %v248
    %v891 = vunpack.c.h.b16 %v248
    %v892 = vunpack.c.l.b16 %v249
    %v893 = vunpack.c.h.b16 %v249
    %v894 = vunpack.c.l.b16 %v250
    %v895 = vunpack.c.h.b16 %v250
    %v896 = vunpack.c.l.b16 %v251
    %v897 = vunpack.c.h.b16 %v251
    %v898 = vunpack.c.l.b16 %v252
    %v899 = vunpack.c.h.b16 %v252
    %v900 = vunpack.c.l.b16 %v253
    %v901 = vunpack.c.h.b16 %v253
    %v902 = vunpack.c.l.b16 %v254
    %v903 = vunpack.c.h.b16 %v254
    %v904 = vunpack.c.l.b16 %v255
    %v905 = vunpack.c.h.b16 %v255
    %v906 = vunpack.c.l.b16 %v256
    %v907 = vunpack.c.h.b16 %v256
    %v908 = vunpack.c.l.b16 %v257
    %v909 = vunpack.c.h.b16 %v257
    %v910 = vunpack.c.l.b16 %v258
    %v911 = vunpack.c.h.b16 %v258
    %v912 = vunpack.c.l.b16 %v259
    %v913 = vunpack.c.h.b16 %v259
    %v914 = vunpack.c.l.b16 %v260
    %v915 = vunpack.c.h.b16 %v260
    %v916 = vunpack.c.l.b16 %v261
    %v917 = vunpack.c.h.b16 %v261
    %v918 = vunpack.c.l.b16 %v262
    %v919 = vunpack.c.h.b16 %v262
    %v920 = vunpack.c.l.b16 %v263
    %v921 = vunpack.c.h.b16 %v263
    %v922 = vunpack.c.l.b16 %v264
    %v923 = vunpack.c.h.b16 %v264
    %v924 = vunpack.c.l.b16 %v265
    %v925 = vunpack.c.h.b16 %v265
    %v926 = vunpack.c.l.b16 %v266
    %v927 = vunpack.c.h.b16 %v266
    %v928 = vunpack.c.l.b16 %v267
    %v929 = vunpack.c.h.b16 %v267
    %v930 = vunpack.c.l.b16 %v268
    %v931 = vunpack.c.h.b16 %v268
    %v932 = vunpack.c.l.b16 %v269
    %v933 = vunpack.c.h.b16 %v269
    %v934 = vunpack.c.l.b16 %v270
    %v935 = vunpack.c.h.b16 %v270
    %v936 = vunpack.c.l.b16 %v271
    %v937 = vunpack.c.h.b16 %v271
    %v938 = vunpack.c.l.b16 %v272
    %v939 = vunpack.c.h.b16 %v272
    %v940 = vunpack.c.l.b16 %v273
    %v941 = vunpack.c.h.b16 %v273
    %v942 = vunpack.c.l.b16 %v274
    %v943 = vunpack.c.h.b16 %v274
    %v944 = vunpack.c.l.b16 %v275
    %v945 = vunpack.c.h.b16 %v275
    %v946 = vunpack.c.l.b16 %v276
    %v947 = vunpack.c.h.b16 %v276
    %v948 = vunpack.c.l.b16 %v277
    %v949 = vunpack.c.h.b16 %v277
    %v950 = vunpack.c.l.b16 %v278
    %v951 = vunpack.c.h.b16 %v278
    %v952 = vunpack.c.l.b16 %v279
    %v953 = vunpack.c.h.b16 %v279
    %v954 = vunpack.c.l.b16 %v280
    %v955 = vunpack.c.h.b16 %v280
    %v956 = vunpack.c.l.b16 %v281
    %v957 = vunpack.c.h.b16 %v281
    %v958 = vunpack.c.l.b16 %v282
    %v959 = vunpack.c.h.b16 %v282
    %v960 = vunpack.c.l.b16 %v283
    %v961 = vunpack.c.h.b16 %v283
    %v962 = vunpack.c.l.b16 %v284
    %v963 = vunpack.c.h.b16 %v284
    %v964 = vunpack.c.l.b16 %v285
    %v965 = vunpack.c.h.b16 %v285
    %v966 = vunpack.c.l.b16 %v286
    %v967 = vunpack.c.h.b16 %v286
    %v968 = vunpack.c.l.b16 %v287
    %v969 = vunpack.c.h.b16 %v287
    %v970 = vunpack.c.l.b16 %v288
    %v971 = vunpack.c.h.b16 %v288
    %v972 = vunpack.c.l.b16 %v289
    %v973 = vunpack.c.h.b16 %v289
    %v974 = vunpack.c.l.b16 %v290
    %v975 = vunpack.c.h.b16 %v290
    %v976 = vunpack.c.l.b16 %v291
    %v977 = vunpack.c.h.b16 %v291
    %v978 = vunpack.c.l.b16 %v292
    %v979 = vunpack.c.h.b16 %v292
    %v980 = vunpack.c.l.b16 %v293
    %v981 = vunpack.c.h.b16 %v293
    %v982 = vunpack.c.l.b16 %v294
    %v983 = vunpack.c.h.b16 %v294
    %v984 = vunpack.c.l.b16 %v295
    %v985 = vunpack.c.h.b16 %v295
    %v986 = vunpack.c.l.b16 %v296
    %v987 = vunpack.c.h.b16 %v296
    %v988 = vunpack.c.l.b16 %v297
    %v989 = vunpack.c.h.b16 %v297
    %v990 = vunpack.c.l.b16 %v298
    %v991 = vunpack.c.h.b16 %v298
    %v992 = vunpack.c.l.b16 %v299
    %v993 = vunpack.c.h.b16 %v299
    %v994 = vunpack.c.l.b16 %v300
    %v995 = vunpack.c.h.b16 %v300
    %v996 = vunpack.c.l.b16 %v301
    %v997 = vunpack.c.h.b16 %v301
    %v998 = vunpack.c.l.b16 %v302
    %v999 = vunpack.c.h.b16 %v302
    %v1000 = vunpack.c.l.b16 %v303
    %v1001 = vunpack.c.h.b16 %v303
    %v1002 = vunpack.c.l.b16 %v304
    %v1003 = vunpack.c.h.b16 %v304
    %v1004 = vunpack.c.l.b16 %v305
    %v1005 = vunpack.c.h.b16 %v305
    %v1006 = vunpack.c.l.b16 %v306
    %v1007 = vunpack.c.h.b16 %v306
    %v1008 = vunpack.c.l.b16 %v307
    %v1009 = vunpack.c.h.b16 %v307
    %v1010 = vunpack.c.l.b16 %v308
    %v1011 = vunpack.c.h.b16 %v308
    %v1012 = vunpack.c.l.b16 %v309
    %v1013 = vunpack.c.h.b16 %v309
    %v1014 = vunpack.c.l.b16 %v310
    %v1015 = vunpack.c.h.b16 %v310
    %v1016 = vunpack.c.l.b16 %v311
    %v1017 = vunpack.c.h.b16 %v311
    %v1018 = vunpack.c.l.b16 %v312
    %v1019 = vunpack.c.h.b16 %v312
    %v1020 = vunpack.c.l.b16 %v313
    %v1021 = vunpack.c.h.b16 %v313
    %v1022 = vunpack.c.l.b16 %v314
    %v1023 = vunpack.c.h.b16 %v314
    %v1024 = vunpack.c.l.b16 %v315
    %v1025 = vunpack.c.h.b16 %v315
    %v1026 = vunpack.c.l.b16 %v316
    %v1027 = vunpack.c.h.b16 %v316
    %v1028 = vunpack.c.l.b16 %v317
    %v1029 = vunpack.c.h.b16 %v317
    %v1030 = vunpack.c.l.b16 %v318
    %v1031 = vunpack.c.h.b16 %v318
    %v1032 = vunpack.c.l.b16 %v319
    %v1033 = vunpack.c.h.b16 %v319
    %v1034 = vunpack.c.l.b16 %v320
    %v1035 = vunpack.c.h.b16 %v320
    %v1036 = vunpack.c.l.b16 %v321
    %v1037 = vunpack.c.h.b16 %v321
    %v1038 = vunpack.c.l.b16 %v322
    %v1039 = vunpack.c.h.b16 %v322
    %v1040 = vunpack.c.l.b16 %v323
    %v1041 = vunpack.c.h.b16 %v323
    %v1042 = vunpack.c.l.b16 %v324
    %v1043 = vunpack.c.h.b16 %v324
    %v1044 = vunpack.c.l.b16 %v325
    %v1045 = vunpack.c.h.b16 %v325
    %v1046 = vunpack.c.l.b16 %v326
    %v1047 = vunpack.c.h.b16 %v326
    %v1048 = vunpack.c.l.b16 %v327
    %v1049 = vunpack.c.h.b16 %v327
    %v1050 = vunpack.c.l.b16 %v328
    %v1051 = vunpack.c.h.b16 %v328
    %v1052 = vunpack.c.l.b16 %v329
    %v1053 = vunpack.c.h.b16 %v329
    %v1054 = vunpack.c.l.b16 %v330
    %v1055 = vunpack.c.h.b16 %v330
    %v1056 = vunpack.c.l.b16 %v331
    %v1057 = vunpack.c.h.b16 %v331
    %v1058 = vunpack.c.l.b16 %v332
    %v1059 = vunpack.c.h.b16 %v332
    %v1060 = vunpack.c.l.b16 %v333
    %v1061 = vunpack.c.h.b16 %v333
    %v1062 = vunpack.c.l.b16 %v334
    %v1063 = vunpack.c.h.b16 %v334
    %v1064 = vunpack.c.l.b16 %v335
    %v1065 = vunpack.c.h.b16 %v335
    %v1066 = vunpack.c.l.b16 %v336
    %v1067 = vunpack.c.h.b16 %v336
    %v1068 = vunpack.c.l.b16 %v337
    %v1069 = vunpack.c.h.b16 %v337
    %v1070 = vunpack.c.l.b16 %v338
    %v1071 = vunpack.c.h.b16 %v338
    %v1072 = vunpack.c.l.b16 %v339
    %v1073 = vunpack.c.h.b16 %v339
    %v1074 = vunpack.c.l.b16 %v340
    %v1075 = vunpack.c.h.b16 %v340
    %v1076 = vunpack.c.l.b16 %v341
    %v1077 = vunpack.c.h.b16 %v341
    %v1078 = vunpack.c.l.b16 %v342
    %v1079 = vunpack.c.h.b16 %v342
    %v1080 = vunpack.c.l.b16 %v343
    %v1081 = vunpack.c.h.b16 %v343
    %v1082 = vunpack.c.l.b16 %v344
    %v1083 = vunpack.c.h.b16 %v344
    %v1084 = vunpack.c.l.b16 %v345
    %v1085 = vunpack.c.h.b16 %v345
    %v1086 = vunpack.c.l.b16 %v346
    %v1087 = vunpack.c.h.b16 %v346
    %v1088 = vunpack.c.l.b16 %v347
    %v1089 = vunpack.c.h.b16 %v347
    %v1090 = vunpack.c.l.b16 %v348
    %v1091 = vunpack.c.h.b16 %v348
    %v1092 = vunpack.c.l.b16 %v349
    %v1093 = vunpack.c.h.b16 %v349
    %v1094 = vunpack.c.l.b16 %v350
    %v1095 = vunpack.c.h.b16 %v350
    %v1096 = vunpack.c.l.b16 %v351
    %v1097 = vunpack.c.h.b16 %v351
    %v1098 = vunpack.c.l.b16 %v352
    %v1099 = vunpack.c.h.b16 %v352
    %v1100 = vunpack.c.l.b16 %v353
    %v1101 = vunpack.c.h.b16 %v353
    %v1102 = vunpack.c.l.b16 %v354
    %v1103 = vunpack.c.h.b16 %v354
    %v1104 = vunpack.c.l.b16 %v355
    %v1105 = vunpack.c.h.b16 %v355
    %v1106 = vunpack.c.l.b16 %v356
    %v1107 = vunpack.c.h.b16 %v356
    %v1108 = vunpack.c.l.b16 %v357
    %v1109 = vunpack.c.h.b16 %v357
    %v1110 = vunpack.c.l.b16 %v358
    %v1111 = vunpack.c.h.b16 %v358
    %v1112 = vunpack.c.l.b16 %v359
    %v1113 = vunpack.c.h.b16 %v359
    %v1114 = vunpack.c.l.b16 %v360
    %v1115 = vunpack.c.h.b16 %v360
    %v1116 = vunpack.c.l.b16 %v361
    %v1117 = vunpack.c.h.b16 %v361
    %v1118 = vunpack.c.l.b16 %v362
    %v1119 = vunpack.c.h.b16 %v362
    %v1120 = vunpack.c.l.b16 %v363
    %v1121 = vunpack.c.h.b16 %v363
    %v1122 = vunpack.c.l.b16 %v364
    %v1123 = vunpack.c.h.b16 %v364
    %v1124 = vunpack.c.l.b16 %v365
    %v1125 = vunpack.c.h.b16 %v365
    %v1126 = vunpack.c.l.b16 %v366
    %v1127 = vunpack.c.h.b16 %v366
    %v1128 = vunpack.c.l.b16 %v367
    %v1129 = vunpack.c.h.b16 %v367
    %v1130 = vunpack.c.l.b16 %v368
    %v1131 = vunpack.c.h.b16 %v368
    %v1132 = vunpack.c.l.b16 %v369
    %v1133 = vunpack.c.h.b16 %v369
    %v1134 = vunpack.c.l.b16 %v370
    %v1135 = vunpack.c.h.b16 %v370
    %v1136 = vunpack.c.l.b16 %v371
    %v1137 = vunpack.c.h.b16 %v371
    %v1138 = vunpack.c.l.b16 %v372
    %v1139 = vunpack.c.h.b16 %v372
    %v1140 = vunpack.c.l.b16 %v373
    %v1141 = vunpack.c.h.b16 %v373
    %v1142 = vunpack.c.l.b16 %v374
    %v1143 = vunpack.c.h.b16 %v374
    %v1144 = vunpack.c.l.b16 %v375
    %v1145 = vunpack.c.h.b16 %v375
    %v1146 = vunpack.c.l.b16 %v376
    %v1147 = vunpack.c.h.b16 %v376
    %v1148 = vunpack.c.l.b16 %v377
    %v1149 = vunpack.c.h.b16 %v377
    %v1150 = vunpack.c.l.b16 %v378
    %v1151 = vunpack.c.h.b16 %v378
    %v1152 = vunpack.c.l.b16 %v379
    %v1153 = vunpack.c.h.b16 %v379
    %v1154 = vunpack.c.l.b16 %v380
    %v1155 = vunpack.c.h.b16 %v380
    %v1156 = vunpack.c.l.b16 %v381
    %v1157 = vunpack.c.h.b16 %v381
    %v1158 = vunpack.c.l.b16 %v382
    %v1159 = vunpack.c.h.b16 %v382
    %v1160 = vunpack.c.l.b16 %v383
    %v1161 = vunpack.c.h.b16 %v383
    %v1162 = vunpack.c.l.b16 %v384
    %v1163 = vunpack.c.h.b16 %v384
    %v1164 = vunpack.c.l.b16 %v385
    %v1165 = vunpack.c.h.b16 %v385
    %v1166 = vunpack.c.l.b16 %v386
    %v1167 = vunpack.c.h.b16 %v386
    %v1168 = vunpack.c.l.b16 %v387
    %v1169 = vunpack.c.h.b16 %v387
    %v1170 = vunpack.c.l.b16 %v388
    %v1171 = vunpack.c.h.b16 %v388
    %v1172 = vunpack.c.l.b16 %v389
    %v1173 = vunpack.c.h.b16 %v389
    %v1174 = vunpack.c.l.b16 %v390
    %v1175 = vunpack.c.h.b16 %v390
    %v1176 = vunpack.c.l.b16 %v391
    %v1177 = vunpack.c.h.b16 %v391
    %v1178 = vunpack.c.l.b16 %v392
    %v1179 = vunpack.c.h.b16 %v392
    %v1180 = vunpack.c.l.b16 %v393
    %v1181 = vunpack.c.h.b16 %v393
    %v1182 = vunpack.c.l.b16 %v394
    %v1183 = vunpack.c.h.b16 %v394
    %v1184 = vunpack.c.l.b16 %v395
    %v1185 = vunpack.c.h.b16 %v395
    %v1186 = vunpack.c.l.b16 %v396
    %v1187 = vunpack.c.h.b16 %v396
    %v1188 = vunpack.c.l.b16 %v397
    %v1189 = vunpack.c.h.b16 %v397
    %v1190 = vunpack.c.l.b16 %v398
    %v1191 = vunpack.c.h.b16 %v398
    %v1192 = vunpack.c.l.b16 %v399
    %v1193 = vunpack.c.h.b16 %v399
    %v1194 = vunpack.c.l.b16 %v400
    %v1195 = vunpack.c.h.b16 %v400
    %v1196 = vunpack.c.l.b16 %v401
    %v1197 = vunpack.c.h.b16 %v401
    %v1198 = vunpack.c.l.b16 %v402
    %v1199 = vunpack.c.h.b16 %v402
    %v1200 = vunpack.c.l.b16 %v403
    %v1201 = vunpack.c.h.b16 %v403
    %v1202 = vunpack.c.l.b16 %v404
    %v1203 = vunpack.c.h.b16 %v404
    %v1204 = vunpack.c.l.b16 %v405
    %v1205 = vunpack.c.h.b16 %v405
    %v1206 = vunpack.c.l.b16 %v406
    %v1207 = vunpack.c.h.b16 %v406
    %v1208 = vunpack.c.l.b16 %v407
    %v1209 = vunpack.c.h.b16 %v407
    %v1210 = vunpack.c.l.b16 %v408
    %v1211 = vunpack.c.h.b16 %v408
    %v1212 = vunpack.c.l.b16 %v409
    %v1213 = vunpack.c.h.b16 %v409
    %v1214 = vunpack.c.l.b16 %v410
    %v1215 = vunpack.c.h.b16 %v410
    %v1216 = vunpack.c.l.b16 %v411
    %v1217 = vunpack.c.h.b16 %v411
    %v1218 = vunpack.c.l.b16 %v412
    %v1219 = vunpack.c.h.b16 %v412
    %v1220 = vunpack.c.l.b16 %v413
    %v1221 = vunpack.c.h.b16 %v413
    %v1222 = vunpack.c.l.b16 %v414
    %v1223 = vunpack.c.h.b16 %v414
    %v1224 = vunpack.c.l.b16 %v415
    %v1225 = vunpack.c.h.b16 %v415
    %v1226 = vunpack.c.l.b16 %v416
    %v1227 = vunpack.c.h.b16 %v416
    %v1228 = vunpack.c.l.b16 %v417
    %v1229 = vunpack.c.h.b16 %v417
    %v1230 = vunpack.c.l.b16 %v418
    %v1231 = vunpack.c.h.b16 %v418
    %v1232 = vunpack.c.l.b16 %v419
    %v1233 = vunpack.c.h.b16 %v419
    %v1234 = vunpack.c.l.b16 %v420
    %v1235 = vunpack.c.h.b16 %v420
    %v1236 = vunpack.c.l.b16 %v421
    %v1237 = vunpack.c.h.b16 %v421
    %v1238 = vunpack.c.l.b16 %v422
    %v1239 = vunpack.c.h.b16 %v422
    %v1240 = vunpack.c.l.b16 %v423
    %v1241 = vunpack.c.h.b16 %v423
    %v1242 = vunpack.c.l.b16 %v424
    %v1243 = vunpack.c.h.b16 %v424
    %v1244 = vunpack.c.l.b16 %v425
    %v1245 = vunpack.c.h.b16 %v425
    %v1246 = vunpack.c.l.b16 %v426
    %v1247 = vunpack.c.h.b16 %v426
    %v1248 = vunpack.c.l.b16 %v427
    %v1249 = vunpack.c.h.b16 %v427
    %v1250 = vunpack.c.l.b16 %v428
    %v1251 = vunpack.c.h.b16 %v428
    %v1252 = vunpack.c.l.b16 %v429
    %v1253 = vunpack.c.h.b16 %v429
    %v1254 = vunpack.c.l.b16 %v430
    %v1255 = vunpack.c.h.b16 %v430
    %v1256 = vunpack.c.l.b16 %v431
    %v1257 = vunpack.c.h.b16 %v431
    %v1258 = vunpack.c.l.b16 %v432
    %v1259 = vunpack.c.h.b16 %v432
    %v1260 = vunpack.c.l.b16 %v433
    %v1261 = vunpack.c.h.b16 %v433
    %v1262 = vunpack.c.l.b16 %v434
    %v1263 = vunpack.c.h.b16 %v434
    %v1264 = vunpack.c.l.b16 %v435
    %v1265 = vunpack.c.h.b16 %v435
    %v1266 = vunpack.c.l.b16 %v436
    %v1267 = vunpack.c.h.b16 %v436
    %v1268 = vunpack.c.l.b16 %v437
    %v1269 = vunpack.c.h.b16 %v437
    %v1270 = vunpack.c.l.b16 %v438
    %v1271 = vunpack.c.h.b16 %v438
    %v1272 = vunpack.c.l.b16 %v439
    %v1273 = vunpack.c.h.b16 %v439
    %v1274 = vunpack.c.l.b16 %v440
    %v1275 = vunpack.c.h.b16 %v440
    %v1276 = vunpack.c.l.b16 %v441
    %v1277 = vunpack.c.h.b16 %v441
    %v1278 = vpack.c.b16 %v768, %v766
    %v1279 = vpack.c.b16 %v769, %v767
    %v1280 = vpack.c.b16 %v772, %v770
    %v1281 = vpack.c.b16 %v773, %v771
    %v1282 = vpack.c.b16 %v776, %v774
    %v1283 = vpack.c.b16 %v777, %v775
    %v1284 = vpack.c.b16 %v780, %v778
    %v1285 = vpack.c.b16 %v781, %v779
    %v1286 = vpack.c.b16 %v784, %v782
    %v1287 = vpack.c.b16 %v785, %v783
    %v1288 = vpack.c.b16 %v788, %v786
    %v1289 = vpack.c.b16 %v789, %v787
    %v1290 = vpack.c.b16 %v792, %v790
    %v1291 = vpack.c.b16 %v793, %v791
    %v1292 = vpack.c.b16 %v796, %v794
    %v1293 = vpack.c.b16 %v797, %v795
    %v1294 = vpack.c.b16 %v800, %v798
    %v1295 = vpack.c.b16 %v801, %v799
    %v1296 = vpack.c.b16 %v804, %v802
    %v1297 = vpack.c.b16 %v805, %v803
    %v1298 = vpack.c.b16 %v808, %v806
    %v1299 = vpack.c.b16 %v809, %v807
    %v1300 = vpack.c.b16 %v812, %v810
    %v1301 = vpack.c.b16 %v813, %v811
    %v1302 = vpack.c.b16 %v816, %v814
    %v1303 = vpack.c.b16 %v817, %v815
    %v1304 = vpack.c.b16 %v820, %v818
    %v1305 = vpack.c.b16 %v821, %v819
    %v1306 = vpack.c.b16 %v824, %v822
    %v1307 = vpack.c.b16 %v825, %v823
    %v1308 = vpack.c.b16 %v828, %v826
    %v1309 = vpack.c.b16 %v829, %v827
    %v1310 = vpack.c.b16 %v832, %v830
    %v1311 = vpack.c.b16 %v833, %v831
    %v1312 = vpack.c.b16 %v836, %v834
    %v1313 = vpack.c.b16 %v837, %v835
    %v1314 = vpack.c.b16 %v840, %v838
    %v1315 = vpack.c.b16 %v841, %v839
    %v1316 = vpack.c.b16 %v844, %v842
    %v1317 = vpack.c.b16 %v845, %v843
    %v1318 = vpack.c.b16 %v848, %v846
    %v1319 = vpack.c.b16 %v849, %v847
    %v1320 = vpack.c.b16 %v852, %v850
    %v1321 = vpack.c.b16 %v853, %v851
    %v1322 = vpack.c.b16 %v856, %v854
    %v1323 = vpack.c.b16 %v857, %v855
    %v1324 = vpack.c.b16 %v860, %v858
    %v1325 = vpack.c.b16 %v861, %v859
    %v1326 = vpack.c.b16 %v864, %v862
    %v1327 = vpack.c.b16 %v865, %v863
    %v1328 = vpack.c.b16 %v868, %v866
    %v1329 = vpack.c.b16 %v869, %v867
    %v1330 = vpack.c.b16 %v872, %v870
    %v1331 = vpack.c.b16 %v873, %v871
    %v1332 = vpack.c.b16 %v876, %v874
    %v1333 = vpack.c.b16 %v877, %v875
    %v1334 = vpack.c.b16 %v880, %v878
    %v1335 = vpack.c.b16 %v881, %v879
    %v1336 = vpack.c.b16 %v884, %v882
    %v1337 = vpack.c.b16 %v885, %v883
    %v1338 = vpack.c.b16 %v888, %v886
    %v1339 = vpack.c.b16 %v889, %v887
    %v1340 = vpack.c.b16 %v892, %v890
    %v1341 = vpack.c.b16 %v893, %v891
    %v1342 = vpack.c.b16 %v896, %v894
    %v1343 = vpack.c.b16 %v897, %v895
    %v1344 = vpack.c.b16 %v900, %v898
    %v1345 = vpack.c.b16 %v901, %v899
    %v1346 = vpack.c.b16 %v904, %v902
    %v1347 = vpack.c.b16 %v905, %v903
    %v1348 = vpack.c.b16 %v908, %v906
    %v1349 = vpack.c.b16 %v909, %v907
    %v1350 = vpack.c.b16 %v912, %v910
    %v1351 = vpack.c.b16 %v913, %v911
    %v1352 = vpack.c.b16 %v916, %v914
    %v1353 = vpack.c.b16 %v917, %v915
    %v1354 = vpack.c.b16 %v920, %v918
    %v1355 = vpack.c.b16 %v921, %v919
    %v1356 = vpack.c.b16 %v924, %v922
    %v1357 = vpack.c.b16 %v925, %v923
    %v1358 = vpack.c.b16 %v928, %v926
    %v1359 = vpack.c.b16 %v929, %v927
    %v1360 = vpack.c.b16 %v932, %v930
    %v1361 = vpack.c.b16 %v933, %v931
    %v1362 = vpack.c.b16 %v936, %v934
    %v1363 = vpack.c.b16 %v937, %v935
    %v1364 = vpack.c.b16 %v940, %v938
    %v1365 = vpack.c.b16 %v941, %v939
    %v1366 = vpack.c.b16 %v944, %v942
    %v1367 = vpack.c.b16 %v945, %v943
    %v1368 = vpack.c.b16 %v948, %v946
    %v1369 = vpack.c.b16 %v949, %v947
    %v1370 = vpack.c.b16 %v952, %v950
    %v1371 = vpack.c.b16 %v953, %v951
    %v1372 = vpack.c.b16 %v956, %v954
    %v1373 = vpack.c.b16 %v957, %v955
    %v1374 = vpack.c.b16 %v960, %v958
    %v1375 = vpack.c.b16 %v961, %v959
    %v1376 = vpack.c.b16 %v964, %v962
    %v1377 = vpack.c.b16 %v965, %v963
    %v1378 = vpack.c.b16 %v968, %v966
    %v1379 = vpack.c.b16 %v969, %v967
    %v1380 = vpack.c.b16 %v972, %v970
    %v1381 = vpack.c.b16 %v973, %v971
    %v1382 = vpack.c.b16 %v976, %v974
    %v1383 = vpack.c.b16 %v977, %v975
    %v1384 = vpack.c.b16 %v980, %v978
    %v1385 = vpack.c.b16 %v981, %v979
    %v1386 = vpack.c.b16 %v984, %v982
    %v1387 = vpack.c.b16 %v985, %v983
    %v1388 = vpack.c.b16 %v988, %v986
    %v1389 = vpack.c.b16 %v989, %v987
    %v1390 = vpack.c.b16 %v992, %v990
    %v1391 = vpack.c.b16 %v993, %v991
    %v1392 = vpack.c.b16 %v996, %v994
    %v1393 = vpack.c.b16 %v997, %v995
    %v1394 = vpack.c.b16 %v1000, %v998
    %v1395 = vpack.c.b16 %v1001, %v999
    %v1396 = vpack.c.b16 %v1004, %v1002
    %v1397 = vpack.c.b16 %v1005, %v1003
    %v1398 = vpack.c.b16 %v1008, %v1006
    %v1399 = vpack.c.b16 %v1009, %v1007
    %v1400 = vpack.c.b16 %v1012, %v1010
    %v1401 = vpack.c.b16 %v1013, %v1011
    %v1402 = vpack.c.b16 %v1016, %v1014
    %v1403 = vpack.c.b16 %v1017, %v1015
    %v1404 = vpack.c.b16 %v1020, %v1018
    %v1405 = vpack.c.b16 %v1021, %v1019
    %v1406 = vpack.c.b16 %v1024, %v1022
    %v1407 = vpack.c.b16 %v1025, %v1023
    %v1408 = vpack.c.b16 %v1028, %v1026
    %v1409 = vpack.c.b16 %v1029, %v1027
    %v1410 = vpack.c.b16 %v1032, %v1030
    %v1411 = vpack.c.b16 %v1033, %v1031
    %v1412 = vpack.c.b16 %v1036, %v1034
    %v1413 = vpack.c.b16 %v1037, %v1035
    %v1414 = vpack.c.b16 %v1040, %v1038
    %v1415 = vpack.c.b16 %v1041, %v1039
    %v1416 = vpack.c.b16 %v1044, %v1042
    %v1417 = vpack.c.b16 %v1045, %v1043
    %v1418 = vpack.c.b16 %v1048, %v1046
    %v1419 = vpack.c.b16 %v1049, %v1047
    %v1420 = vpack.c.b16 %v1052, %v1050
    %v1421 = vpack.c.b16 %v1053, %v1051
    %v1422 = vpack.c.b16 %v1056, %v1054
    %v1423 = vpack.c.b16 %v1057, %v1055
    %v1424 = vpack.c.b16 %v1060, %v1058
    %v1425 = vpack.c.b16 %v1061, %v1059
    %v1426 = vpack.c.b16 %v1064, %v1062
    %v1427 = vpack.c.b16 %v1065, %v1063
    %v1428 = vpack.c.b16 %v1068, %v1066
    %v1429 = vpack.c.b16 %v1069, %v1067
    %v1430 = vpack.c.b16 %v1072, %v1070
    %v1431 = vpack.c.b16 %v1073, %v1071
    %v1432 = vpack.c.b16 %v1076, %v1074
    %v1433 = vpack.c.b16 %v1077, %v1075
    %v1434 = vpack.c.b16 %v1080, %v1078
    %v1435 = vpack.c.b16 %v1081, %v1079
    %v1436 = vpack.c.b16 %v1084, %v1082
    %v1437 = vpack.c.b16 %v1085, %v1083
    %v1438 = vpack.c.b16 %v1088, %v1086
    %v1439 = vpack.c.b16 %v1089, %v1087
    %v1440 = vpack.c.b16 %v1092, %v1090
    %v1441 = vpack.c.b16 %v1093, %v1091
    %v1442 = vpack.c.b16 %v1096, %v1094
    %v1443 = vpack.c.b16 %v1097, %v1095
    %v1444 = vpack.c.b16 %v1100, %v1098
    %v1445 = vpack.c.b16 %v1101, %v1099
    %v1446 = vpack.c.b16 %v1104, %v1102
    %v1447 = vpack.c.b16 %v1105, %v1103
    %v1448 = vpack.c.b16 %v1108, %v1106
    %v1449 = vpack.c.b16 %v1109, %v1107
    %v1450 = vpack.c.b16 %v1112, %v1110
    %v1451 = vpack.c.b16 %v1113, %v1111
    %v1452 = vpack.c.b16 %v1116, %v1114
    %v1453 = vpack.c.b16 %v1117, %v1115
    %v1454 = vpack.c.b16 %v1120, %v1118
    %v1455 = vpack.c.b16 %v1121, %v1119
    %v1456 = vpack.c.b16 %v1124, %v1122
    %v1457 = vpack.c.b16 %v1125, %v1123
    %v1458 = vpack.c.b16 %v1128, %v1126
    %v1459 = vpack.c.b16 %v1129, %v1127
    %v1460 = vpack.c.b16 %v1132, %v1130
    %v1461 = vpack.c.b16 %v1133, %v1131
    %v1462 = vpack.c.b16 %v1136, %v1134
    %v1463 = vpack.c.b16 %v1137, %v1135
    %v1464 = vpack.c.b16 %v1140, %v1138
    %v1465 = vpack.c.b16 %v1141, %v1139
    %v1466 = vpack.c.b16 %v1144, %v1142
    %v1467 = vpack.c.b16 %v1145, %v1143
    %v1468 = vpack.c.b16 %v1148, %v1146
    %v1469 = vpack.c.b16 %v1149, %v1147
    %v1470 = vpack.c.b16 %v1152, %v1150
    %v1471 = vpack.c.b16 %v1153, %v1151
    %v1472 = vpack.c.b16 %v1156, %v1154
    %v1473 = vpack.c.b16 %v1157, %v1155
    %v1474 = vpack.c.b16 %v1160, %v1158
    %v1475 = vpack.c.b16 %v1161, %v1159
    %v1476 = vpack.c.b16 %v1164, %v1162
    %v1477 = vpack.c.b16 %v1165, %v1163
    %v1478 = vpack.c.b16 %v1168, %v1166
    %v1479 = vpack.c.b16 %v1169, %v1167
    %v1480 = vpack.c.b16 %v1172, %v1170
    %v1481 = vpack.c.b16 %v1173, %v1171
    %v1482 = vpack.c.b16 %v1176, %v1174
    %v1483 = vpack.c.b16 %v1177, %v1175
    %v1484 = vpack.c.b16 %v1180, %v1178
    %v1485 = vpack.c.b16 %v1181, %v1179
    %v1486 = vpack.c.b16 %v1184, %v1182
    %v1487 = vpack.c.b16 %v1185, %v1183
    %v1488 = vpack.c.b16 %v1188, %v1186
    %v1489 = vpack.c.b16 %v1189, %v1187
    %v1490 = vpack.c.b16 %v1192, %v1190
    %v1491 = vpack.c.b16 %v1193, %v1191
    %v1492 = vpack.c.b16 %v1196, %v1194
    %v1493 = vpack.c.b16 %v1197, %v1195
    %v1494 = vpack.c.b16 %v1200, %v1198
    %v1495 = vpack.c.b16 %v1201, %v1199
    %v1496 = vpack.c.b16 %v1204, %v1202
    %v1497 = vpack.c.b16 %v1205, %v1203
    %v1498 = vpack.c.b16 %v1208, %v1206
    %v1499 = vpack.c.b16 %v1209, %v1207
    %v1500 = vpack.c.b16 %v1212, %v1210
    %v1501 = vpack.c.b16 %v1213, %v1211
    %v1502 = vpack.c.b16 %v1216, %v1214
    %v1503 = vpack.c.b16 %v1217, %v1215
    %v1504 = vpack.c.b16 %v1220, %v1218
    %v1505 = vpack.c.b16 %v1221, %v1219
    %v1506 = vpack.c.b16 %v1224, %v1222
    %v1507 = vpack.c.b16 %v1225, %v1223
    %v1508 = vpack.c.b16 %v1228, %v1226
    %v1509 = vpack.c.b16 %v1229, %v1227
    %v1510 = vpack.c.b16 %v1232, %v1230
    %v1511 = vpack.c.b16 %v1233, %v1231
    %v1512 = vpack.c.b16 %v1236, %v1234
    %v1513 = vpack.c.b16 %v1237, %v1235
    %v1514 = vpack.c.b16 %v1240, %v1238
    %v1515 = vpack.c.b16 %v1241, %v1239
    %v1516 = vpack.c.b16 %v1244, %v1242
    %v1517 = vpack.c.b16 %v1245, %v1243
    %v1518 = vpack.c.b16 %v1248, %v1246
    %v1519 = vpack.c.b16 %v1249, %v1247
    %v1520 = vpack.c.b16 %v1252, %v1250
    %v1521 = vpack.c.b16 %v1253, %v1251
    %v1522 = vpack.c.b16 %v1256, %v1254
    %v1523 = vpack.c.b16 %v1257, %v1255
    %v1524 = vpack.c.b16 %v1260, %v1258
    %v1525 = vpack.c.b16 %v1261, %v1259
    %v1526 = vpack.c.b16 %v1264, %v1262
    %v1527 = vpack.c.b16 %v1265, %v1263
    %v1528 = vpack.c.b16 %v1268, %v1266
    %v1529 = vpack.c.b16 %v1269, %v1267
    %v1530 = vpack.c.b16 %v1272, %v1270
    %v1531 = vpack.c.b16 %v1273, %v1271
    %v1532 = vpack.c.b16 %v1276, %v1274
    %v1533 = vpack.c.b16 %v1277, %v1275
    %1790 = vmatprep.subr.bf16.mxu0 %v1293
    %1791 = vmatpush1.bf16.msra.mxu0 %v1292
    %1792 = vmatprep.subr.bf16.mxu0 %v1291
    %1793 = vmatpush1.bf16.msra.mxu0 %v1290
    %1794 = vmatprep.subr.bf16.mxu0 %v1289
    %1795 = vmatpush1.bf16.msra.mxu0 %v1288
    %1796 = vmatprep.subr.bf16.mxu0 %v1287
    %1797 = vmatpush1.bf16.msra.mxu0 %v1286
    %1798 = vmatprep.subr.bf16.mxu0 %v1285
    %1799 = vmatpush1.bf16.msra.mxu0 %v1284
    %1800 = vmatprep.subr.bf16.mxu0 %v1283
    %1801 = vmatpush1.bf16.msra.mxu0 %v1282
    %1802 = vmatprep.subr.bf16.mxu0 %v1281
    %1803 = vmatpush1.bf16.msra.mxu0 %v1280
    %1804 = vmatprep.subr.bf16.mxu0 %v1279
    %1805 = vmatpush1.bf16.msra.mxu0 %v1278
    %1806 = vmatprep.subr.bf16.mxu0 %v1309
    %1807 = vmatpush2.bf16.msra.mxu0 %v1308
    %1808 = vmatprep.subr.bf16.mxu0 %v1307
    %1809 = vmatpush2.bf16.msra.mxu0 %v1306
    %1810 = vmatprep.subr.bf16.mxu0 %v1305
    %1811 = vmatpush2.bf16.msra.mxu0 %v1304
    %1812 = vmatprep.subr.bf16.mxu0 %v1303
    %1813 = vmatpush2.bf16.msra.mxu0 %v1302
    %1814 = vmatprep.subr.bf16.mxu0 %v1301
    %1815 = vmatpush2.bf16.msra.mxu0 %v1300
    %1816 = vmatprep.subr.bf16.mxu0 %v1299
    %1817 = vmatpush2.bf16.msra.mxu0 %v1298
    %1818 = vmatprep.subr.bf16.mxu0 %v1297
    %1819 = vmatpush2.bf16.msra.mxu0 %v1296
    %1820 = vmatprep.subr.bf16.mxu0 %v1295
    %1821 = vmatpush2.bf16.msra.mxu0 %v1294
    %1822 = vmatprep.mubr.bf16.mxu0 %v479
    %1823 = vmatmul.mubr.bf16.gmra.mxu0 %v478
    %v1824 = vpop.f32.mrf.mxu0
    %v1825 = vadd.f32 %v447, %v1824
    %v1826 = vpop.f32.mrf.mxu0
    %v1827 = vadd.f32 %v451, %v1826
    %v1828 = vpop.f32.mrf.mxu0
    %v1829 = vpop.f32.mrf.mxu0
    %1830 = vdwg.mxu0
    %1831 = vmatprep.subr.bf16.mxu0 %v1325
    %1832 = vmatpush1.bf16.msra.mxu0 %v1324
    %1833 = vmatprep.subr.bf16.mxu0 %v1323
    %1834 = vmatpush1.bf16.msra.mxu0 %v1322
    %1835 = vmatprep.subr.bf16.mxu0 %v1321
    %1836 = vmatpush1.bf16.msra.mxu0 %v1320
    %1837 = vmatprep.subr.bf16.mxu0 %v1319
    %1838 = vmatpush1.bf16.msra.mxu0 %v1318
    %1839 = vmatprep.subr.bf16.mxu0 %v1317
    %1840 = vmatpush1.bf16.msra.mxu0 %v1316
    %1841 = vmatprep.subr.bf16.mxu0 %v1315
    %1842 = vmatpush1.bf16.msra.mxu0 %v1314
    %1843 = vmatprep.subr.bf16.mxu0 %v1313
    %1844 = vmatpush1.bf16.msra.mxu0 %v1312
    %1845 = vmatprep.subr.bf16.mxu0 %v1311
    %1846 = vmatpush1.bf16.msra.mxu0 %v1310
    %1847 = vmatprep.subr.bf16.mxu0 %v1341
    %1848 = vmatpush2.bf16.msra.mxu0 %v1340
    %1849 = vmatprep.subr.bf16.mxu0 %v1339
    %1850 = vmatpush2.bf16.msra.mxu0 %v1338
    %1851 = vmatprep.subr.bf16.mxu0 %v1337
    %1852 = vmatpush2.bf16.msra.mxu0 %v1336
    %1853 = vmatprep.subr.bf16.mxu0 %v1335
    %1854 = vmatpush2.bf16.msra.mxu0 %v1334
    %1855 = vmatprep.subr.bf16.mxu0 %v1333
    %1856 = vmatpush2.bf16.msra.mxu0 %v1332
    %1857 = vmatprep.subr.bf16.mxu0 %v1331
    %1858 = vmatpush2.bf16.msra.mxu0 %v1330
    %1859 = vmatprep.subr.bf16.mxu0 %v1329
    %1860 = vmatpush2.bf16.msra.mxu0 %v1328
    %1861 = vmatprep.subr.bf16.mxu0 %v1327
    %1862 = vmatpush2.bf16.msra.mxu0 %v1326
    %1863 = vmatprep.mubr.bf16.mxu0 %v481
    %1864 = vmatmul.mubr.bf16.gmra.mxu0 %v480
    %v1865 = vpop.f32.mrf.mxu0
    %v1866 = vadd.f32 %v1825, %v1865
    %v1867 = vpop.f32.mrf.mxu0
    %v1868 = vadd.f32 %v1827, %v1867
    %v1869 = vpop.f32.mrf.mxu0
    %v1870 = vpop.f32.mrf.mxu0
    %1871 = vdwg.mxu0
    %1872 = vmatprep.subr.bf16.mxu0 %v1357
    %1873 = vmatpush1.bf16.msra.mxu0 %v1356
    %1874 = vmatprep.subr.bf16.mxu0 %v1355
    %1875 = vmatpush1.bf16.msra.mxu0 %v1354
    %1876 = vmatprep.subr.bf16.mxu0 %v1353
    %1877 = vmatpush1.bf16.msra.mxu0 %v1352
    %1878 = vmatprep.subr.bf16.mxu0 %v1351
    %1879 = vmatpush1.bf16.msra.mxu0 %v1350
    %1880 = vmatprep.subr.bf16.mxu0 %v1349
    %1881 = vmatpush1.bf16.msra.mxu0 %v1348
    %1882 = vmatprep.subr.bf16.mxu0 %v1347
    %1883 = vmatpush1.bf16.msra.mxu0 %v1346
    %1884 = vmatprep.subr.bf16.mxu0 %v1345
    %1885 = vmatpush1.bf16.msra.mxu0 %v1344
    %1886 = vmatprep.subr.bf16.mxu0 %v1343
    %1887 = vmatpush1.bf16.msra.mxu0 %v1342
    %1888 = vmatprep.subr.bf16.mxu0 %v1373
    %1889 = vmatpush2.bf16.msra.mxu0 %v1372
    %1890 = vmatprep.subr.bf16.mxu0 %v1371
    %1891 = vmatpush2.bf16.msra.mxu0 %v1370
    %1892 = vmatprep.subr.bf16.mxu0 %v1369
    %1893 = vmatpush2.bf16.msra.mxu0 %v1368
    %1894 = vmatprep.subr.bf16.mxu0 %v1367
    %1895 = vmatpush2.bf16.msra.mxu0 %v1366
    %1896 = vmatprep.subr.bf16.mxu0 %v1365
    %1897 = vmatpush2.bf16.msra.mxu0 %v1364
    %1898 = vmatprep.subr.bf16.mxu0 %v1363
    %1899 = vmatpush2.bf16.msra.mxu0 %v1362
    %1900 = vmatprep.subr.bf16.mxu0 %v1361
    %1901 = vmatpush2.bf16.msra.mxu0 %v1360
    %1902 = vmatprep.subr.bf16.mxu0 %v1359
    %1903 = vmatpush2.bf16.msra.mxu0 %v1358
    %1904 = vmatprep.mubr.bf16.mxu0 %v483
    %1905 = vmatmul.mubr.bf16.gmra.mxu0 %v482
    %v1906 = vpop.f32.mrf.mxu0
    %v1907 = vadd.f32 %v1866, %v1906
    %v1908 = vpop.f32.mrf.mxu0
    %v1909 = vadd.f32 %v1868, %v1908
    %v1910 = vpop.f32.mrf.mxu0
    %v1911 = vpop.f32.mrf.mxu0
    %1912 = vdwg.mxu0
    %1913 = vmatprep.subr.bf16.mxu0 %v1389
    %1914 = vmatpush1.bf16.msra.mxu0 %v1388
    %1915 = vmatprep.subr.bf16.mxu0 %v1387
    %1916 = vmatpush1.bf16.msra.mxu0 %v1386
    %1917 = vmatprep.subr.bf16.mxu0 %v1385
    %1918 = vmatpush1.bf16.msra.mxu0 %v1384
    %1919 = vmatprep.subr.bf16.mxu0 %v1383
    %1920 = vmatpush1.bf16.msra.mxu0 %v1382
    %1921 = vmatprep.subr.bf16.mxu0 %v1381
    %1922 = vmatpush1.bf16.msra.mxu0 %v1380
    %1923 = vmatprep.subr.bf16.mxu0 %v1379
    %1924 = vmatpush1.bf16.msra.mxu0 %v1378
    %1925 = vmatprep.subr.bf16.mxu0 %v1377
    %1926 = vmatpush1.bf16.msra.mxu0 %v1376
    %1927 = vmatprep.subr.bf16.mxu0 %v1375
    %1928 = vmatpush1.bf16.msra.mxu0 %v1374
    %1929 = vmatprep.subr.bf16.mxu0 %v1405
    %1930 = vmatpush2.bf16.msra.mxu0 %v1404
    %1931 = vmatprep.subr.bf16.mxu0 %v1403
    %1932 = vmatpush2.bf16.msra.mxu0 %v1402
    %1933 = vmatprep.subr.bf16.mxu0 %v1401
    %1934 = vmatpush2.bf16.msra.mxu0 %v1400
    %1935 = vmatprep.subr.bf16.mxu0 %v1399
    %1936 = vmatpush2.bf16.msra.mxu0 %v1398
    %1937 = vmatprep.subr.bf16.mxu0 %v1397
    %1938 = vmatpush2.bf16.msra.mxu0 %v1396
    %1939 = vmatprep.subr.bf16.mxu0 %v1395
    %1940 = vmatpush2.bf16.msra.mxu0 %v1394
    %1941 = vmatprep.subr.bf16.mxu0 %v1393
    %1942 = vmatpush2.bf16.msra.mxu0 %v1392
    %1943 = vmatprep.subr.bf16.mxu0 %v1391
    %1944 = vmatpush2.bf16.msra.mxu0 %v1390
    %1945 = vmatprep.mubr.bf16.mxu0 %v485
    %1946 = vmatmul.mubr.bf16.gmra.mxu0 %v484
    %v1947 = vpop.f32.mrf.mxu0
    %v1948 = vadd.f32 %v1907, %v1947
    %v1949 = vpop.f32.mrf.mxu0
    %v1950 = vadd.f32 %v1909, %v1949
    %v1951 = vpop.f32.mrf.mxu0
    %v1952 = vpop.f32.mrf.mxu0
    %1953 = vdwg.mxu0
    %1954 = vmatprep.subr.bf16.mxu0 %v1421
    %1955 = vmatpush1.bf16.msra.mxu0 %v1420
    %1956 = vmatprep.subr.bf16.mxu0 %v1419
    %1957 = vmatpush1.bf16.msra.mxu0 %v1418
    %1958 = vmatprep.subr.bf16.mxu0 %v1417
    %1959 = vmatpush1.bf16.msra.mxu0 %v1416
    %1960 = vmatprep.subr.bf16.mxu0 %v1415
    %1961 = vmatpush1.bf16.msra.mxu0 %v1414
    %1962 = vmatprep.subr.bf16.mxu0 %v1413
    %1963 = vmatpush1.bf16.msra.mxu0 %v1412
    %1964 = vmatprep.subr.bf16.mxu0 %v1411
    %1965 = vmatpush1.bf16.msra.mxu0 %v1410
    %1966 = vmatprep.subr.bf16.mxu0 %v1409
    %1967 = vmatpush1.bf16.msra.mxu0 %v1408
    %1968 = vmatprep.subr.bf16.mxu0 %v1407
    %1969 = vmatpush1.bf16.msra.mxu0 %v1406
    %1970 = vmatprep.subr.bf16.mxu0 %v1437
    %1971 = vmatpush2.bf16.msra.mxu0 %v1436
    %1972 = vmatprep.subr.bf16.mxu0 %v1435
    %1973 = vmatpush2.bf16.msra.mxu0 %v1434
    %1974 = vmatprep.subr.bf16.mxu0 %v1433
    %1975 = vmatpush2.bf16.msra.mxu0 %v1432
    %1976 = vmatprep.subr.bf16.mxu0 %v1431
    %1977 = vmatpush2.bf16.msra.mxu0 %v1430
    %1978 = vmatprep.subr.bf16.mxu0 %v1429
    %1979 = vmatpush2.bf16.msra.mxu0 %v1428
    %1980 = vmatprep.subr.bf16.mxu0 %v1427
    %1981 = vmatpush2.bf16.msra.mxu0 %v1426
    %1982 = vmatprep.subr.bf16.mxu0 %v1425
    %1983 = vmatpush2.bf16.msra.mxu0 %v1424
    %1984 = vmatprep.subr.bf16.mxu0 %v1423
    %1985 = vmatpush2.bf16.msra.mxu0 %v1422
    %1986 = vmatprep.mubr.bf16.mxu0 %v487
    %1987 = vmatmul.mubr.bf16.gmra.mxu0 %v486
    %v1988 = vpop.f32.mrf.mxu0
    %v1989 = vadd.f32 %v1948, %v1988
    %v1990 = vpop.f32.mrf.mxu0
    %v1991 = vadd.f32 %v1950, %v1990
    %v1992 = vpop.f32.mrf.mxu0
    %v1993 = vpop.f32.mrf.mxu0
    %1994 = vdwg.mxu0
    %1995 = vmatprep.subr.bf16.mxu0 %v1453
    %1996 = vmatpush1.bf16.msra.mxu0 %v1452
    %1997 = vmatprep.subr.bf16.mxu0 %v1451
    %1998 = vmatpush1.bf16.msra.mxu0 %v1450
    %1999 = vmatprep.subr.bf16.mxu0 %v1449
    %2000 = vmatpush1.bf16.msra.mxu0 %v1448
    %2001 = vmatprep.subr.bf16.mxu0 %v1447
    %2002 = vmatpush1.bf16.msra.mxu0 %v1446
    %2003 = vmatprep.subr.bf16.mxu0 %v1445
    %2004 = vmatpush1.bf16.msra.mxu0 %v1444
    %2005 = vmatprep.subr.bf16.mxu0 %v1443
    %2006 = vmatpush1.bf16.msra.mxu0 %v1442
    %2007 = vmatprep.subr.bf16.mxu0 %v1441
    %2008 = vmatpush1.bf16.msra.mxu0 %v1440
    %2009 = vmatprep.subr.bf16.mxu0 %v1439
    %2010 = vmatpush1.bf16.msra.mxu0 %v1438
    %2011 = vmatprep.subr.bf16.mxu0 %v1469
    %2012 = vmatpush2.bf16.msra.mxu0 %v1468
    %2013 = vmatprep.subr.bf16.mxu0 %v1467
    %2014 = vmatpush2.bf16.msra.mxu0 %v1466
    %2015 = vmatprep.subr.bf16.mxu0 %v1465
    %2016 = vmatpush2.bf16.msra.mxu0 %v1464
    %2017 = vmatprep.subr.bf16.mxu0 %v1463
    %2018 = vmatpush2.bf16.msra.mxu0 %v1462
    %2019 = vmatprep.subr.bf16.mxu0 %v1461
    %2020 = vmatpush2.bf16.msra.mxu0 %v1460
    %2021 = vmatprep.subr.bf16.mxu0 %v1459
    %2022 = vmatpush2.bf16.msra.mxu0 %v1458
    %2023 = vmatprep.subr.bf16.mxu0 %v1457
    %2024 = vmatpush2.bf16.msra.mxu0 %v1456
    %2025 = vmatprep.subr.bf16.mxu0 %v1455
    %2026 = vmatpush2.bf16.msra.mxu0 %v1454
    %2027 = vmatprep.mubr.bf16.mxu0 %v489
    %2028 = vmatmul.mubr.bf16.gmra.mxu0 %v488
    %v2029 = vpop.f32.mrf.mxu0
    %v2030 = vadd.f32 %v1989, %v2029
    %v2031 = vpop.f32.mrf.mxu0
    %v2032 = vadd.f32 %v1991, %v2031
    %v2033 = vpop.f32.mrf.mxu0
    %v2034 = vpop.f32.mrf.mxu0
    %2035 = vdwg.mxu0
    %2036 = vmatprep.subr.bf16.mxu0 %v1485
    %2037 = vmatpush1.bf16.msra.mxu0 %v1484
    %2038 = vmatprep.subr.bf16.mxu0 %v1483
    %2039 = vmatpush1.bf16.msra.mxu0 %v1482
    %2040 = vmatprep.subr.bf16.mxu0 %v1481
    %2041 = vmatpush1.bf16.msra.mxu0 %v1480
    %2042 = vmatprep.subr.bf16.mxu0 %v1479
    %2043 = vmatpush1.bf16.msra.mxu0 %v1478
    %2044 = vmatprep.subr.bf16.mxu0 %v1477
    %2045 = vmatpush1.bf16.msra.mxu0 %v1476
    %2046 = vmatprep.subr.bf16.mxu0 %v1475
    %2047 = vmatpush1.bf16.msra.mxu0 %v1474
    %2048 = vmatprep.subr.bf16.mxu0 %v1473
    %2049 = vmatpush1.bf16.msra.mxu0 %v1472
    %2050 = vmatprep.subr.bf16.mxu0 %v1471
    %2051 = vmatpush1.bf16.msra.mxu0 %v1470
    %2052 = vmatprep.subr.bf16.mxu0 %v1501
    %2053 = vmatpush2.bf16.msra.mxu0 %v1500
    %2054 = vmatprep.subr.bf16.mxu0 %v1499
    %2055 = vmatpush2.bf16.msra.mxu0 %v1498
    %2056 = vmatprep.subr.bf16.mxu0 %v1497
    %2057 = vmatpush2.bf16.msra.mxu0 %v1496
    %2058 = vmatprep.subr.bf16.mxu0 %v1495
    %2059 = vmatpush2.bf16.msra.mxu0 %v1494
    %2060 = vmatprep.subr.bf16.mxu0 %v1493
    %2061 = vmatpush2.bf16.msra.mxu0 %v1492
    %2062 = vmatprep.subr.bf16.mxu0 %v1491
    %2063 = vmatpush2.bf16.msra.mxu0 %v1490
    %2064 = vmatprep.subr.bf16.mxu0 %v1489
    %2065 = vmatpush2.bf16.msra.mxu0 %v1488
    %2066 = vmatprep.subr.bf16.mxu0 %v1487
    %2067 = vmatpush2.bf16.msra.mxu0 %v1486
    %2068 = vmatprep.mubr.bf16.mxu0 %v491
    %2069 = vmatmul.mubr.bf16.gmra.mxu0 %v490
    %v2070 = vpop.f32.mrf.mxu0
    %v2071 = vadd.f32 %v2030, %v2070
    %v2072 = vpop.f32.mrf.mxu0
    %v2073 = vadd.f32 %v2032, %v2072
    %v2074 = vpop.f32.mrf.mxu0
    %v2075 = vpop.f32.mrf.mxu0
    %2076 = vdwg.mxu0
    %2077 = vmatprep.subr.bf16.mxu0 %v1517
    %2078 = vmatpush1.bf16.msra.mxu0 %v1516
    %2079 = vmatprep.subr.bf16.mxu0 %v1515
    %2080 = vmatpush1.bf16.msra.mxu0 %v1514
    %2081 = vmatprep.subr.bf16.mxu0 %v1513
    %2082 = vmatpush1.bf16.msra.mxu0 %v1512
    %2083 = vmatprep.subr.bf16.mxu0 %v1511
    %2084 = vmatpush1.bf16.msra.mxu0 %v1510
    %2085 = vmatprep.subr.bf16.mxu0 %v1509
    %2086 = vmatpush1.bf16.msra.mxu0 %v1508
    %2087 = vmatprep.subr.bf16.mxu0 %v1507
    %2088 = vmatpush1.bf16.msra.mxu0 %v1506
    %2089 = vmatprep.subr.bf16.mxu0 %v1505
    %2090 = vmatpush1.bf16.msra.mxu0 %v1504
    %2091 = vmatprep.subr.bf16.mxu0 %v1503
    %2092 = vmatpush1.bf16.msra.mxu0 %v1502
    %2093 = vmatprep.subr.bf16.mxu0 %v1533
    %2094 = vmatpush2.bf16.msra.mxu0 %v1532
    %2095 = vmatprep.subr.bf16.mxu0 %v1531
    %2096 = vmatpush2.bf16.msra.mxu0 %v1530
    %2097 = vmatprep.subr.bf16.mxu0 %v1529
    %2098 = vmatpush2.bf16.msra.mxu0 %v1528
    %2099 = vmatprep.subr.bf16.mxu0 %v1527
    %2100 = vmatpush2.bf16.msra.mxu0 %v1526
    %2101 = vmatprep.subr.bf16.mxu0 %v1525
    %2102 = vmatpush2.bf16.msra.mxu0 %v1524
    %2103 = vmatprep.subr.bf16.mxu0 %v1523
    %2104 = vmatpush2.bf16.msra.mxu0 %v1522
    %2105 = vmatprep.subr.bf16.mxu0 %v1521
    %2106 = vmatpush2.bf16.msra.mxu0 %v1520
    %2107 = vmatprep.subr.bf16.mxu0 %v1519
    %2108 = vmatpush2.bf16.msra.mxu0 %v1518
    %2109 = vmatprep.mubr.bf16.mxu0 %v493
    %2110 = vmatmul.mubr.bf16.gmra.mxu0 %v492
    %v2111 = vpop.f32.mrf.mxu0
    %v2112 = vadd.f32 %v2071, %v2111
    %v2113 = vpop.f32.mrf.mxu0
    %v2114 = vadd.f32 %v2073, %v2113
    %v2115 = vpop.f32.mrf.mxu0
    %v2116 = vpop.f32.mrf.mxu0
    %2117 = vdwg.mxu0
    %v2118 = vmax.f32 %v2112, 0.0
    %v2119 = vmax.f32 %v2114, 0.0
    %v2120 = vpack.c.bf16 %v2118, %v2118
    %v2121 = vpack.c.bf16 %v2119, %v2119
    %v2122 = vld [vmem:[#allocation7] sm:$0xf]
    %v2123 = vld [vmem:[#allocation7 + $0x4] sm:$0xf]
    %v2124 = vld [vmem:[#allocation7 + $0x8] sm:$0xf]
    %v2125 = vld [vmem:[#allocation7 + $0xc] sm:$0xf]
    %v2126 = vld [vmem:[#allocation7 + $0x10] sm:$0xf]
    %v2127 = vld [vmem:[#allocation7 + $0x14] sm:$0xf]
    %v2128 = vld [vmem:[#allocation7 + $0x18] sm:$0xf]
    %v2129 = vld [vmem:[#allocation7 + $0x1c] sm:$0xf]
    %v2130 = vld [vmem:[#allocation7 + $0x20] sm:$0xf]
    %v2131 = vld [vmem:[#allocation7 + $0x24] sm:$0xf]
    %v2132 = vld [vmem:[#allocation7 + $0x28] sm:$0xf]
    %v2133 = vld [vmem:[#allocation7 + $0x2c] sm:$0xf]
    %v2134 = vld [vmem:[#allocation7 + $0x30] sm:$0xf]
    %v2135 = vld [vmem:[#allocation7 + $0x34] sm:$0xf]
    %v2136 = vld [vmem:[#allocation7 + $0x38] sm:$0xf]
    %v2137 = vld [vmem:[#allocation7 + $0x3c] sm:$0xf]
    %v2138 = vld [vmem:[#allocation7 + $0x40] sm:$0xf]
    %v2139 = vld [vmem:[#allocation7 + $0x44] sm:$0xf]
    %v2140 = vld [vmem:[#allocation7 + $0x48] sm:$0xf]
    %v2141 = vld [vmem:[#allocation7 + $0x4c] sm:$0xf]
    %v2142 = vld [vmem:[#allocation7 + $0x50] sm:$0xf]
    %v2143 = vld [vmem:[#allocation7 + $0x54] sm:$0xf]
    %v2144 = vld [vmem:[#allocation7 + $0x58] sm:$0xf]
    %v2145 = vld [vmem:[#allocation7 + $0x5c] sm:$0xf]
    %v2146 = vld [vmem:[#allocation7 + $0x60] sm:$0xf]
    %v2147 = vld [vmem:[#allocation7 + $0x64] sm:$0xf]
    %v2148 = vld [vmem:[#allocation7 + $0x68] sm:$0xf]
    %v2149 = vld [vmem:[#allocation7 + $0x6c] sm:$0xf]
    %v2150 = vld [vmem:[#allocation7 + $0x70] sm:$0xf]
    %v2151 = vld [vmem:[#allocation7 + $0x74] sm:$0xf]
    %v2152 = vld [vmem:[#allocation7 + $0x78] sm:$0xf]
    %v2153 = vld [vmem:[#allocation7 + $0x7c] sm:$0xf]
    %v2154 = vld [vmem:[%s4] sm:$0x1]
    %v2156 = vlaneseq
    %v2157 = vshrl.u32 %v2156, 7
    %v2158 = vsub.s32 0, %v2157
    %v2159 = vrot.slane %v2154, %v2158
    %v2193 = vunpack.c.l.b16 %v2122
    %v2194 = vunpack.c.l.b16 %v2123
    %v2195 = vunpack.c.l.b16 %v2124
    %v2196 = vunpack.c.l.b16 %v2125
    %v2197 = vunpack.c.l.b16 %v2126
    %v2198 = vunpack.c.l.b16 %v2127
    %v2199 = vunpack.c.l.b16 %v2128
    %v2200 = vunpack.c.l.b16 %v2129
    %v2201 = vunpack.c.l.b16 %v2130
    %v2202 = vunpack.c.l.b16 %v2131
    %v2203 = vunpack.c.l.b16 %v2132
    %v2204 = vunpack.c.l.b16 %v2133
    %v2205 = vunpack.c.l.b16 %v2134
    %v2206 = vunpack.c.l.b16 %v2135
    %v2207 = vunpack.c.l.b16 %v2136
    %v2208 = vunpack.c.l.b16 %v2137
    %v2209 = vunpack.c.l.b16 %v2138
    %v2210 = vunpack.c.l.b16 %v2139
    %v2211 = vunpack.c.l.b16 %v2140
    %v2212 = vunpack.c.l.b16 %v2141
    %v2213 = vunpack.c.l.b16 %v2142
    %v2214 = vunpack.c.l.b16 %v2143
    %v2215 = vunpack.c.l.b16 %v2144
    %v2216 = vunpack.c.l.b16 %v2145
    %v2217 = vunpack.c.l.b16 %v2146
    %v2218 = vunpack.c.l.b16 %v2147
    %v2219 = vunpack.c.l.b16 %v2148
    %v2220 = vunpack.c.l.b16 %v2149
    %v2221 = vunpack.c.l.b16 %v2150
    %v2222 = vunpack.c.l.b16 %v2151
    %v2223 = vunpack.c.l.b16 %v2152
    %v2224 = vunpack.c.l.b16 %v2153
    %v2225 = vpack.c.b16 %v2194, %v2193
    %v2226 = vpack.c.b16 %v2196, %v2195
    %v2227 = vpack.c.b16 %v2198, %v2197
    %v2228 = vpack.c.b16 %v2200, %v2199
    %v2229 = vpack.c.b16 %v2202, %v2201
    %v2230 = vpack.c.b16 %v2204, %v2203
    %v2231 = vpack.c.b16 %v2206, %v2205
    %v2232 = vpack.c.b16 %v2208, %v2207
    %v2233 = vpack.c.b16 %v2210, %v2209
    %v2234 = vpack.c.b16 %v2212, %v2211
    %v2235 = vpack.c.b16 %v2214, %v2213
    %v2236 = vpack.c.b16 %v2216, %v2215
    %v2237 = vpack.c.b16 %v2218, %v2217
    %v2238 = vpack.c.b16 %v2220, %v2219
    %v2239 = vpack.c.b16 %v2222, %v2221
    %v2240 = vpack.c.b16 %v2224, %v2223
    %2257 = vmatprep.subr.bf16.mxu0 0
    %2258 = vmatpush1.bf16.msra.mxu0 %v2232
    %2259 = vmatprep.subr.bf16.mxu0 0
    %2260 = vmatpush1.bf16.msra.mxu0 %v2231
    %2261 = vmatprep.subr.bf16.mxu0 0
    %2262 = vmatpush1.bf16.msra.mxu0 %v2230
    %2263 = vmatprep.subr.bf16.mxu0 0
    %2264 = vmatpush1.bf16.msra.mxu0 %v2229
    %2265 = vmatprep.subr.bf16.mxu0 0
    %2266 = vmatpush1.bf16.msra.mxu0 %v2228
    %2267 = vmatprep.subr.bf16.mxu0 0
    %2268 = vmatpush1.bf16.msra.mxu0 %v2227
    %2269 = vmatprep.subr.bf16.mxu0 0
    %2270 = vmatpush1.bf16.msra.mxu0 %v2226
    %2271 = vmatprep.subr.bf16.mxu0 0
    %2272 = vmatpush1.bf16.msra.mxu0 %v2225
    %2273 = vmatprep.subr.bf16.mxu0 0
    %2274 = vmatpush2.bf16.msra.mxu0 %v2240
    %2275 = vmatprep.subr.bf16.mxu0 0
    %2276 = vmatpush2.bf16.msra.mxu0 %v2239
    %2277 = vmatprep.subr.bf16.mxu0 0
    %2278 = vmatpush2.bf16.msra.mxu0 %v2238
    %2279 = vmatprep.subr.bf16.mxu0 0
    %2280 = vmatpush2.bf16.msra.mxu0 %v2237
    %2281 = vmatprep.subr.bf16.mxu0 0
    %2282 = vmatpush2.bf16.msra.mxu0 %v2236
    %2283 = vmatprep.subr.bf16.mxu0 0
    %2284 = vmatpush2.bf16.msra.mxu0 %v2235
    %2285 = vmatprep.subr.bf16.mxu0 0
    %2286 = vmatpush2.bf16.msra.mxu0 %v2234
    %2287 = vmatprep.subr.bf16.mxu0 0
    %2288 = vmatpush2.bf16.msra.mxu0 %v2233
    %2289 = vmatprep.mubr.bf16.mxu0 %v2121
    %2290 = vmatmul.mubr.bf16.gmra.mxu0 %v2120
    %v2291 = vpop.f32.mrf.mxu0
    %v2292 = vadd.f32 %v2159, %v2291
    %v2293 = vpop.f32.mrf.mxu0
    %v2294 = vpop.f32.mrf.mxu0
    %v2295 = vpop.f32.mrf.mxu0
    %2296 = vdwg.mxu0
    %v2297 = vmax.f32 %v2292, 0.0
    %v2298 = vpack.c.bf16 %v2297, %v2297
    %v2299 = vld [vmem:[#allocation8] sm:$0xf]
    %v2300 = vld [vmem:[#allocation8 + $0x4] sm:$0xf]
    %v2301 = vld [vmem:[#allocation8 + $0x8] sm:$0xf]
    %v2302 = vld [vmem:[#allocation8 + $0xc] sm:$0xf]
    %v2303 = vld [vmem:[#allocation8 + $0x10] sm:$0xf]
    %v2304 = vld [vmem:[#allocation8 + $0x14] sm:$0xf]
    %v2305 = vld [vmem:[#allocation8 + $0x18] sm:$0xf]
    %v2306 = vld [vmem:[#allocation8 + $0x1c] sm:$0xf]
    %v2307 = vld [vmem:[#allocation8 + $0x20] sm:$0xf]
    %v2308 = vld [vmem:[#allocation8 + $0x24] sm:$0xf]
    %v2309 = vld [vmem:[#allocation8 + $0x28] sm:$0xf]
    %v2310 = vld [vmem:[#allocation8 + $0x2c] sm:$0xf]
    %v2311 = vld [vmem:[#allocation8 + $0x30] sm:$0xf]
    %v2312 = vld [vmem:[#allocation8 + $0x34] sm:$0xf]
    %v2313 = vld [vmem:[#allocation8 + $0x38] sm:$0xf]
    %v2314 = vld [vmem:[#allocation8 + $0x3c] sm:$0xf]
    %v2315 = vld [vmem:[%s6] sm:$0x1]
    %v2317 = vlaneseq
    %v2318 = vshrl.u32 %v2317, 7
    %v2319 = vsub.s32 0, %v2318
    %v2320 = vrot.slane %v2315, %v2319
    %v2338 = vunpack.c.l.b16 %v2299
    %v2339 = vunpack.c.l.b16 %v2300
    %v2340 = vunpack.c.l.b16 %v2301
    %v2341 = vunpack.c.l.b16 %v2302
    %v2342 = vunpack.c.l.b16 %v2303
    %v2343 = vunpack.c.l.b16 %v2304
    %v2344 = vunpack.c.l.b16 %v2305
    %v2345 = vunpack.c.l.b16 %v2306
    %v2346 = vunpack.c.l.b16 %v2307
    %v2347 = vunpack.c.l.b16 %v2308
    %v2348 = vunpack.c.l.b16 %v2309
    %v2349 = vunpack.c.l.b16 %v2310
    %v2350 = vunpack.c.l.b16 %v2311
    %v2351 = vunpack.c.l.b16 %v2312
    %v2352 = vunpack.c.l.b16 %v2313
    %v2353 = vunpack.c.l.b16 %v2314
    %v2354 = vpack.c.b16 %v2339, %v2338
    %v2355 = vpack.c.b16 %v2341, %v2340
    %v2356 = vpack.c.b16 %v2343, %v2342
    %v2357 = vpack.c.b16 %v2345, %v2344
    %v2358 = vpack.c.b16 %v2347, %v2346
    %v2359 = vpack.c.b16 %v2349, %v2348
    %v2360 = vpack.c.b16 %v2351, %v2350
    %v2361 = vpack.c.b16 %v2353, %v2352
    %2370 = vmatprep.subr.bf16.mxu0 0
    %2371 = vmatpush1.bf16.msra.mxu0 %v2361
    %2372 = vmatprep.subr.bf16.mxu0 0
    %2373 = vmatpush1.bf16.msra.mxu0 %v2360
    %2374 = vmatprep.subr.bf16.mxu0 0
    %2375 = vmatpush1.bf16.msra.mxu0 %v2359
    %2376 = vmatprep.subr.bf16.mxu0 0
    %2377 = vmatpush1.bf16.msra.mxu0 %v2358
    %2378 = vmatprep.subr.bf16.mxu0 0
    %2379 = vmatpush1.bf16.msra.mxu0 %v2357
    %2380 = vmatprep.subr.bf16.mxu0 0
    %2381 = vmatpush1.bf16.msra.mxu0 %v2356
    %2382 = vmatprep.subr.bf16.mxu0 0
    %2383 = vmatpush1.bf16.msra.mxu0 %v2355
    %2384 = vmatprep.subr.bf16.mxu0 0
    %2385 = vmatpush1.bf16.msra.mxu0 %v2354
    %2386 = vmatprep.subr.bf16.mxu0 0
    %2387 = vmatpush2.bf16.msra.mxu0 0
    %2388 = vmatprep.subr.bf16.mxu0 0
    %2389 = vmatpush2.bf16.msra.mxu0 0
    %2390 = vmatprep.subr.bf16.mxu0 0
    %2391 = vmatpush2.bf16.msra.mxu0 0
    %2392 = vmatprep.subr.bf16.mxu0 0
    %2393 = vmatpush2.bf16.msra.mxu0 0
    %2394 = vmatprep.subr.bf16.mxu0 0
    %2395 = vmatpush2.bf16.msra.mxu0 0
    %2396 = vmatprep.subr.bf16.mxu0 0
    %2397 = vmatpush2.bf16.msra.mxu0 0
    %2398 = vmatprep.subr.bf16.mxu0 0
    %2399 = vmatpush2.bf16.msra.mxu0 0
    %2400 = vmatprep.subr.bf16.mxu0 0
    %2401 = vmatpush2.bf16.msra.mxu0 0
    %2402 = vmatprep.mubr.bf16.mxu0 0
    %2403 = vmatmul.mubr.bf16.gmra.mxu0 %v2298
    %v2404 = vpop.f32.mrf.mxu0
    %v2405 = vadd.f32 %v2320, %v2404
    %v2406 = vpop.f32.mrf.mxu0
    %v2407 = vpop.f32.mrf.mxu0
    %v2408 = vpop.f32.mrf.mxu0
    %2409 = vdwg.mxu0
    %v2410 = vmax.f32 %v2405, 0.0
    %v2411 = vpack.c.bf16 %v2410, %v2410
    %v2412 = vld [vmem:[#allocation10] sm:$0xf]
    %v2413 = vld [vmem:[#allocation10 + $0x4] sm:$0xf]
    %v2414 = vld [vmem:[#allocation10 + $0x8] sm:$0xf]
    %v2415 = vld [vmem:[#allocation10 + $0xc] sm:$0xf]
    %v2416 = vld [vmem:[#allocation10 + $0x10] sm:$0xf]
    %v2417 = vld [vmem:[#allocation10 + $0x14] sm:$0xf]
    %v2418 = vld [vmem:[#allocation10 + $0x18] sm:$0xf]
    %v2419 = vld [vmem:[#allocation10 + $0x1c] sm:$0xf]
    %v2420 = vld [vmem:[#allocation10 + $0x20] sm:$0xf]
    %v2421 = vld [vmem:[#allocation10 + $0x24] sm:$0xf]
    %v2422 = vld [vmem:[#allocation10 + $0x28] sm:$0xf]
    %v2423 = vld [vmem:[#allocation10 + $0x2c] sm:$0xf]
    %v2424 = vld [vmem:[#allocation10 + $0x30] sm:$0xf]
    %v2425 = vld [vmem:[#allocation10 + $0x34] sm:$0xf]
    %v2426 = vld [vmem:[#allocation10 + $0x38] sm:$0xf]
    %v2427 = vld [vmem:[#allocation10 + $0x3c] sm:$0xf]
    %v2428 = vld [vmem:[%s8] sm:$0x1]
    %v2430 = vlaneseq
    %v2431 = vshrl.u32 %v2430, 7
    %v2432 = vsub.s32 0, %v2431
    %v2433 = vrot.slane %v2428, %v2432
    %v2451 = vunpack.c.l.b16 %v2412
    %v2452 = vunpack.c.l.b16 %v2413
    %v2453 = vunpack.c.l.b16 %v2414
    %v2454 = vunpack.c.l.b16 %v2415
    %v2455 = vunpack.c.l.b16 %v2416
    %v2456 = vunpack.c.l.b16 %v2417
    %v2457 = vunpack.c.l.b16 %v2418
    %v2458 = vunpack.c.l.b16 %v2419
    %v2459 = vunpack.c.l.b16 %v2420
    %v2460 = vunpack.c.l.b16 %v2421
    %v2461 = vunpack.c.l.b16 %v2422
    %v2462 = vunpack.c.l.b16 %v2423
    %v2463 = vunpack.c.l.b16 %v2424
    %v2464 = vunpack.c.l.b16 %v2425
    %v2465 = vunpack.c.l.b16 %v2426
    %v2466 = vunpack.c.l.b16 %v2427
    %v2467 = vpack.c.b16 %v2452, %v2451
    %v2468 = vpack.c.b16 %v2454, %v2453
    %v2469 = vpack.c.b16 %v2456, %v2455
    %v2470 = vpack.c.b16 %v2458, %v2457
    %v2471 = vpack.c.b16 %v2460, %v2459
    %v2472 = vpack.c.b16 %v2462, %v2461
    %v2473 = vpack.c.b16 %v2464, %v2463
    %v2474 = vpack.c.b16 %v2466, %v2465
    %2483 = vmatprep.subr.bf16.mxu0 0
    %2484 = vmatpush1.bf16.msra.mxu0 %v2474
    %2485 = vmatprep.subr.bf16.mxu0 0
    %2486 = vmatpush1.bf16.msra.mxu0 %v2473
    %2487 = vmatprep.subr.bf16.mxu0 0
    %2488 = vmatpush1.bf16.msra.mxu0 %v2472
    %2489 = vmatprep.subr.bf16.mxu0 0
    %2490 = vmatpush1.bf16.msra.mxu0 %v2471
    %2491 = vmatprep.subr.bf16.mxu0 0
    %2492 = vmatpush1.bf16.msra.mxu0 %v2470
    %2493 = vmatprep.subr.bf16.mxu0 0
    %2494 = vmatpush1.bf16.msra.mxu0 %v2469
    %2495 = vmatprep.subr.bf16.mxu0 0
    %2496 = vmatpush1.bf16.msra.mxu0 %v2468
    %2497 = vmatprep.subr.bf16.mxu0 0
    %2498 = vmatpush1.bf16.msra.mxu0 %v2467
    %2499 = vmatprep.subr.bf16.mxu0 0
    %2500 = vmatpush2.bf16.msra.mxu0 0
    %2501 = vmatprep.subr.bf16.mxu0 0
    %2502 = vmatpush2.bf16.msra.mxu0 0
    %2503 = vmatprep.subr.bf16.mxu0 0
    %2504 = vmatpush2.bf16.msra.mxu0 0
    %2505 = vmatprep.subr.bf16.mxu0 0
    %2506 = vmatpush2.bf16.msra.mxu0 0
    %2507 = vmatprep.subr.bf16.mxu0 0
    %2508 = vmatpush2.bf16.msra.mxu0 0
    %2509 = vmatprep.subr.bf16.mxu0 0
    %2510 = vmatpush2.bf16.msra.mxu0 0
    %2511 = vmatprep.subr.bf16.mxu0 0
    %2512 = vmatpush2.bf16.msra.mxu0 0
    %2513 = vmatprep.subr.bf16.mxu0 0
    %2514 = vmatpush2.bf16.msra.mxu0 0
    %2515 = vmatprep.mubr.bf16.mxu0 0
    %2516 = vmatmul.mubr.bf16.gmra.mxu0 %v2411
    %v2517 = vpop.f32.mrf.mxu0
    %v2518 = vadd.f32 %v2433, %v2517
    %v2519 = vpop.f32.mrf.mxu0
    %v2520 = vpop.f32.mrf.mxu0
    %v2521 = vpop.f32.mrf.mxu0
    %2522 = vdwg.mxu0
    %v2523 = vmax.f32 %v2518, 0.0
    %v2524 = vpack.c.bf16 %v2523, %v2523
    %v2525 = vld [vmem:[#allocation11] sm:$0xf]
    %v2526 = vld [vmem:[#allocation11 + $0x4] sm:$0xf]
    %v2527 = vld [vmem:[#allocation11 + $0x8] sm:$0xf]
    %v2528 = vld [vmem:[#allocation11 + $0xc] sm:$0xf]
    %v2529 = vld [vmem:[#allocation11 + $0x10] sm:$0xf]
    %v2530 = vld [vmem:[#allocation11 + $0x14] sm:$0xf]
    %v2531 = vld [vmem:[#allocation11 + $0x18] sm:$0xf]
    %v2532 = vld [vmem:[#allocation11 + $0x1c] sm:$0xf]
    %v2533 = vld [vmem:[#allocation11 + $0x20] sm:$0xf]
    %v2534 = vld [vmem:[#allocation11 + $0x24] sm:$0xf]
    %v2535 = vld [vmem:[#allocation11 + $0x28] sm:$0xf]
    %v2536 = vld [vmem:[#allocation11 + $0x2c] sm:$0xf]
    %v2537 = vld [vmem:[#allocation11 + $0x30] sm:$0xf]
    %v2538 = vld [vmem:[#allocation11 + $0x34] sm:$0xf]
    %v2539 = vld [vmem:[#allocation11 + $0x38] sm:$0xf]
    %v2540 = vld [vmem:[#allocation11 + $0x3c] sm:$0xf]
    %v2541 = vld [vmem:[%s10] sm:$0x1]
    %v2543 = vlaneseq
    %v2544 = vshrl.u32 %v2543, 7
    %v2545 = vsub.s32 0, %v2544
    %v2546 = vrot.slane %v2541, %v2545
    %v2564 = vunpack.c.l.b16 %v2525
    %v2565 = vunpack.c.l.b16 %v2526
    %v2566 = vunpack.c.l.b16 %v2527
    %v2567 = vunpack.c.l.b16 %v2528
    %v2568 = vunpack.c.l.b16 %v2529
    %v2569 = vunpack.c.l.b16 %v2530
    %v2570 = vunpack.c.l.b16 %v2531
    %v2571 = vunpack.c.l.b16 %v2532
    %v2572 = vunpack.c.l.b16 %v2533
    %v2573 = vunpack.c.l.b16 %v2534
    %v2574 = vunpack.c.l.b16 %v2535
    %v2575 = vunpack.c.l.b16 %v2536
    %v2576 = vunpack.c.l.b16 %v2537
    %v2577 = vunpack.c.l.b16 %v2538
    %v2578 = vunpack.c.l.b16 %v2539
    %v2579 = vunpack.c.l.b16 %v2540
    %v2580 = vpack.c.b16 %v2565, %v2564
    %v2581 = vpack.c.b16 %v2567, %v2566
    %v2582 = vpack.c.b16 %v2569, %v2568
    %v2583 = vpack.c.b16 %v2571, %v2570
    %v2584 = vpack.c.b16 %v2573, %v2572
    %v2585 = vpack.c.b16 %v2575, %v2574
    %v2586 = vpack.c.b16 %v2577, %v2576
    %v2587 = vpack.c.b16 %v2579, %v2578
    %2596 = vmatprep.subr.bf16.mxu0 0
    %2597 = vmatpush1.bf16.msra.mxu0 %v2587
    %2598 = vmatprep.subr.bf16.mxu0 0
    %2599 = vmatpush1.bf16.msra.mxu0 %v2586
    %2600 = vmatprep.subr.bf16.mxu0 0
    %2601 = vmatpush1.bf16.msra.mxu0 %v2585
    %2602 = vmatprep.subr.bf16.mxu0 0
    %2603 = vmatpush1.bf16.msra.mxu0 %v2584
    %2604 = vmatprep.subr.bf16.mxu0 0
    %2605 = vmatpush1.bf16.msra.mxu0 %v2583
    %2606 = vmatprep.subr.bf16.mxu0 0
    %2607 = vmatpush1.bf16.msra.mxu0 %v2582
    %2608 = vmatprep.subr.bf16.mxu0 0
    %2609 = vmatpush1.bf16.msra.mxu0 %v2581
    %2610 = vmatprep.subr.bf16.mxu0 0
    %2611 = vmatpush1.bf16.msra.mxu0 %v2580
    %2612 = vmatprep.subr.bf16.mxu0 0
    %2613 = vmatpush2.bf16.msra.mxu0 0
    %2614 = vmatprep.subr.bf16.mxu0 0
    %2615 = vmatpush2.bf16.msra.mxu0 0
    %2616 = vmatprep.subr.bf16.mxu0 0
    %2617 = vmatpush2.bf16.msra.mxu0 0
    %2618 = vmatprep.subr.bf16.mxu0 0
    %2619 = vmatpush2.bf16.msra.mxu0 0
    %2620 = vmatprep.subr.bf16.mxu0 0
    %2621 = vmatpush2.bf16.msra.mxu0 0
    %2622 = vmatprep.subr.bf16.mxu0 0
    %2623 = vmatpush2.bf16.msra.mxu0 0
    %2624 = vmatprep.subr.bf16.mxu0 0
    %2625 = vmatpush2.bf16.msra.mxu0 0
    %2626 = vmatprep.subr.bf16.mxu0 0
    %2627 = vmatpush2.bf16.msra.mxu0 0
    %2628 = vmatprep.mubr.bf16.mxu0 0
    %2629 = vmatmul.mubr.bf16.gmra.mxu0 %v2524
    %v2630 = vpop.f32.mrf.mxu0
    %v2631 = vadd.f32 %v2546, %v2630
    %v2632 = vpop.f32.mrf.mxu0
    %v2633 = vpop.f32.mrf.mxu0
    %v2634 = vpop.f32.mrf.mxu0
    %2635 = vdwg.mxu0
    %v2636 = vmax.f32 %v2631, 0.0
    %v2637 = vpack.c.bf16 %v2636, %v2636
    %v2638 = vld [vmem:[#allocation13] sm:$0xf]
    %v2639 = vld [vmem:[#allocation13 + $0x4] sm:$0xf]
    %v2640 = vld [vmem:[#allocation13 + $0x8] sm:$0xf]
    %v2641 = vld [vmem:[#allocation13 + $0xc] sm:$0xf]
    %v2642 = vld [vmem:[#allocation13 + $0x10] sm:$0xf]
    %v2643 = vld [vmem:[#allocation13 + $0x14] sm:$0xf]
    %v2644 = vld [vmem:[#allocation13 + $0x18] sm:$0xf]
    %v2645 = vld [vmem:[#allocation13 + $0x1c] sm:$0xf]
    %v2646 = vld [vmem:[#allocation13 + $0x20] sm:$0xf]
    %v2647 = vld [vmem:[#allocation13 + $0x24] sm:$0xf]
    %v2648 = vld [vmem:[#allocation13 + $0x28] sm:$0xf]
    %v2649 = vld [vmem:[#allocation13 + $0x2c] sm:$0xf]
    %v2650 = vld [vmem:[#allocation13 + $0x30] sm:$0xf]
    %v2651 = vld [vmem:[#allocation13 + $0x34] sm:$0xf]
    %v2652 = vld [vmem:[#allocation13 + $0x38] sm:$0xf]
    %v2653 = vld [vmem:[#allocation13 + $0x3c] sm:$0xf]
    %v2654 = vld [vmem:[%s12] sm:$0x1]
    %v2656 = vlaneseq
    %v2657 = vshrl.u32 %v2656, 7
    %v2658 = vsub.s32 0, %v2657
    %v2659 = vrot.slane %v2654, %v2658
    %v2677 = vunpack.c.l.b16 %v2638
    %v2678 = vunpack.c.l.b16 %v2639
    %v2679 = vunpack.c.l.b16 %v2640
    %v2680 = vunpack.c.l.b16 %v2641
    %v2681 = vunpack.c.l.b16 %v2642
    %v2682 = vunpack.c.l.b16 %v2643
    %v2683 = vunpack.c.l.b16 %v2644
    %v2684 = vunpack.c.l.b16 %v2645
    %v2685 = vunpack.c.l.b16 %v2646
    %v2686 = vunpack.c.l.b16 %v2647
    %v2687 = vunpack.c.l.b16 %v2648
    %v2688 = vunpack.c.l.b16 %v2649
    %v2689 = vunpack.c.l.b16 %v2650
    %v2690 = vunpack.c.l.b16 %v2651
    %v2691 = vunpack.c.l.b16 %v2652
    %v2692 = vunpack.c.l.b16 %v2653
    %v2693 = vpack.c.b16 %v2678, %v2677
    %v2694 = vpack.c.b16 %v2680, %v2679
    %v2695 = vpack.c.b16 %v2682, %v2681
    %v2696 = vpack.c.b16 %v2684, %v2683
    %v2697 = vpack.c.b16 %v2686, %v2685
    %v2698 = vpack.c.b16 %v2688, %v2687
    %v2699 = vpack.c.b16 %v2690, %v2689
    %v2700 = vpack.c.b16 %v2692, %v2691
    %2709 = vmatprep.subr.bf16.mxu0 0
    %2710 = vmatpush1.bf16.msra.mxu0 %v2700
    %2711 = vmatprep.subr.bf16.mxu0 0
    %2712 = vmatpush1.bf16.msra.mxu0 %v2699
    %2713 = vmatprep.subr.bf16.mxu0 0
    %2714 = vmatpush1.bf16.msra.mxu0 %v2698
    %2715 = vmatprep.subr.bf16.mxu0 0
    %2716 = vmatpush1.bf16.msra.mxu0 %v2697
    %2717 = vmatprep.subr.bf16.mxu0 0
    %2718 = vmatpush1.bf16.msra.mxu0 %v2696
    %2719 = vmatprep.subr.bf16.mxu0 0
    %2720 = vmatpush1.bf16.msra.mxu0 %v2695
    %2721 = vmatprep.subr.bf16.mxu0 0
    %2722 = vmatpush1.bf16.msra.mxu0 %v2694
    %2723 = vmatprep.subr.bf16.mxu0 0
    %2724 = vmatpush1.bf16.msra.mxu0 %v2693
    %2725 = vmatprep.subr.bf16.mxu0 0
    %2726 = vmatpush2.bf16.msra.mxu0 0
    %2727 = vmatprep.subr.bf16.mxu0 0
    %2728 = vmatpush2.bf16.msra.mxu0 0
    %2729 = vmatprep.subr.bf16.mxu0 0
    %2730 = vmatpush2.bf16.msra.mxu0 0
    %2731 = vmatprep.subr.bf16.mxu0 0
    %2732 = vmatpush2.bf16.msra.mxu0 0
    %2733 = vmatprep.subr.bf16.mxu0 0
    %2734 = vmatpush2.bf16.msra.mxu0 0
    %2735 = vmatprep.subr.bf16.mxu0 0
    %2736 = vmatpush2.bf16.msra.mxu0 0
    %2737 = vmatprep.subr.bf16.mxu0 0
    %2738 = vmatpush2.bf16.msra.mxu0 0
    %2739 = vmatprep.subr.bf16.mxu0 0
    %2740 = vmatpush2.bf16.msra.mxu0 0
    %2741 = vmatprep.mubr.bf16.mxu0 0
    %2742 = vmatmul.mubr.bf16.gmra.mxu0 %v2637
    %v2743 = vpop.f32.mrf.mxu0
    %v2744 = vadd.f32 %v2659, %v2743
    %v2745 = vpop.f32.mrf.mxu0
    %v2746 = vpop.f32.mrf.mxu0
    %v2747 = vpop.f32.mrf.mxu0
    %2748 = vdwg.mxu0
    %v2749 = vmax.f32 %v2744, 0.0
    %v2750 = vpack.c.bf16 %v2749, %v2749
    %v2751 = vld [vmem:[#allocation14] sm:$0xf]
    %v2752 = vld [vmem:[#allocation14 + $0x4] sm:$0xf]
    %v2753 = vld [vmem:[#allocation14 + $0x8] sm:$0xf]
    %v2754 = vld [vmem:[#allocation14 + $0xc] sm:$0xf]
    %v2755 = vld [vmem:[#allocation14 + $0x10] sm:$0xf]
    %v2756 = vld [vmem:[#allocation14 + $0x14] sm:$0xf]
    %v2757 = vld [vmem:[#allocation14 + $0x18] sm:$0xf]
    %v2758 = vld [vmem:[#allocation14 + $0x1c] sm:$0xf]
    %v2759 = vld [vmem:[#allocation14 + $0x20] sm:$0xf]
    %v2760 = vld [vmem:[#allocation14 + $0x24] sm:$0xf]
    %v2761 = vld [vmem:[#allocation14 + $0x28] sm:$0xf]
    %v2762 = vld [vmem:[#allocation14 + $0x2c] sm:$0xf]
    %v2763 = vld [vmem:[#allocation14 + $0x30] sm:$0xf]
    %v2764 = vld [vmem:[#allocation14 + $0x34] sm:$0xf]
    %v2765 = vld [vmem:[#allocation14 + $0x38] sm:$0xf]
    %v2766 = vld [vmem:[#allocation14 + $0x3c] sm:$0xf]
    %v2767 = vld [vmem:[%s14] sm:$0x1]
    %v2769 = vlaneseq
    %v2770 = vshrl.u32 %v2769, 7
    %v2771 = vsub.s32 0, %v2770
    %v2772 = vrot.slane %v2767, %v2771
    %v2790 = vunpack.c.l.b16 %v2751
    %v2791 = vunpack.c.l.b16 %v2752
    %v2792 = vunpack.c.l.b16 %v2753
    %v2793 = vunpack.c.l.b16 %v2754
    %v2794 = vunpack.c.l.b16 %v2755
    %v2795 = vunpack.c.l.b16 %v2756
    %v2796 = vunpack.c.l.b16 %v2757
    %v2797 = vunpack.c.l.b16 %v2758
    %v2798 = vunpack.c.l.b16 %v2759
    %v2799 = vunpack.c.l.b16 %v2760
    %v2800 = vunpack.c.l.b16 %v2761
    %v2801 = vunpack.c.l.b16 %v2762
    %v2802 = vunpack.c.l.b16 %v2763
    %v2803 = vunpack.c.l.b16 %v2764
    %v2804 = vunpack.c.l.b16 %v2765
    %v2805 = vunpack.c.l.b16 %v2766
    %v2806 = vpack.c.b16 %v2791, %v2790
    %v2807 = vpack.c.b16 %v2793, %v2792
    %v2808 = vpack.c.b16 %v2795, %v2794
    %v2809 = vpack.c.b16 %v2797, %v2796
    %v2810 = vpack.c.b16 %v2799, %v2798
    %v2811 = vpack.c.b16 %v2801, %v2800
    %v2812 = vpack.c.b16 %v2803, %v2802
    %v2813 = vpack.c.b16 %v2805, %v2804
    %2822 = vmatprep.subr.bf16.mxu0 0
    %2823 = vmatpush1.bf16.msra.mxu0 %v2813
    %2824 = vmatprep.subr.bf16.mxu0 0
    %2825 = vmatpush1.bf16.msra.mxu0 %v2812
    %2826 = vmatprep.subr.bf16.mxu0 0
    %2827 = vmatpush1.bf16.msra.mxu0 %v2811
    %2828 = vmatprep.subr.bf16.mxu0 0
    %2829 = vmatpush1.bf16.msra.mxu0 %v2810
    %2830 = vmatprep.subr.bf16.mxu0 0
    %2831 = vmatpush1.bf16.msra.mxu0 %v2809
    %2832 = vmatprep.subr.bf16.mxu0 0
    %2833 = vmatpush1.bf16.msra.mxu0 %v2808
    %2834 = vmatprep.subr.bf16.mxu0 0
    %2835 = vmatpush1.bf16.msra.mxu0 %v2807
    %2836 = vmatprep.subr.bf16.mxu0 0
    %2837 = vmatpush1.bf16.msra.mxu0 %v2806
    %2838 = vmatprep.subr.bf16.mxu0 0
    %2839 = vmatpush2.bf16.msra.mxu0 0
    %2840 = vmatprep.subr.bf16.mxu0 0
    %2841 = vmatpush2.bf16.msra.mxu0 0
    %2842 = vmatprep.subr.bf16.mxu0 0
    %2843 = vmatpush2.bf16.msra.mxu0 0
    %2844 = vmatprep.subr.bf16.mxu0 0
    %2845 = vmatpush2.bf16.msra.mxu0 0
    %2846 = vmatprep.subr.bf16.mxu0 0
    %2847 = vmatpush2.bf16.msra.mxu0 0
    %2848 = vmatprep.subr.bf16.mxu0 0
    %2849 = vmatpush2.bf16.msra.mxu0 0
    %2850 = vmatprep.subr.bf16.mxu0 0
    %2851 = vmatpush2.bf16.msra.mxu0 0
    %2852 = vmatprep.subr.bf16.mxu0 0
    %2853 = vmatpush2.bf16.msra.mxu0 0
    %2854 = vmatprep.mubr.bf16.mxu0 0
    %2855 = vmatmul.mubr.bf16.gmra.mxu0 %v2750
    %v2856 = vpop.f32.mrf.mxu0
    %v2857 = vadd.f32 %v2772, %v2856
    %v2858 = vpop.f32.mrf.mxu0
    %v2859 = vpop.f32.mrf.mxu0
    %v2860 = vpop.f32.mrf.mxu0
    %2861 = vdwg.mxu0
    %v2862 = vmax.f32 %v2857, 0.0
    %v2863 = vpack.c.bf16 %v2862, %v2862
    %v2864 = vld [vmem:[#allocation16] sm:$0xf]
    %v2865 = vld [vmem:[#allocation16 + $0x4] sm:$0xf]
    %v2866 = vld [vmem:[#allocation16 + $0x8] sm:$0xf]
    %v2867 = vld [vmem:[#allocation16 + $0xc] sm:$0xf]
    %v2868 = vld [vmem:[#allocation16 + $0x10] sm:$0xf]
    %v2869 = vld [vmem:[#allocation16 + $0x14] sm:$0xf]
    %v2870 = vld [vmem:[#allocation16 + $0x18] sm:$0xf]
    %v2871 = vld [vmem:[#allocation16 + $0x1c] sm:$0xf]
    %v2872 = vld [vmem:[#allocation16 + $0x20] sm:$0xf]
    %v2873 = vld [vmem:[#allocation16 + $0x24] sm:$0xf]
    %v2874 = vld [vmem:[#allocation16 + $0x28] sm:$0xf]
    %v2875 = vld [vmem:[#allocation16 + $0x2c] sm:$0xf]
    %v2876 = vld [vmem:[#allocation16 + $0x30] sm:$0xf]
    %v2877 = vld [vmem:[#allocation16 + $0x34] sm:$0xf]
    %v2878 = vld [vmem:[#allocation16 + $0x38] sm:$0xf]
    %v2879 = vld [vmem:[#allocation16 + $0x3c] sm:$0xf]
    %v2880 = vld [vmem:[%s16] sm:$0x1]
    %v2882 = vlaneseq
    %v2883 = vshrl.u32 %v2882, 7
    %v2884 = vsub.s32 0, %v2883
    %v2885 = vrot.slane %v2880, %v2884
    %v2903 = vunpack.c.l.b16 %v2864
    %v2904 = vunpack.c.l.b16 %v2865
    %v2905 = vunpack.c.l.b16 %v2866
    %v2906 = vunpack.c.l.b16 %v2867
    %v2907 = vunpack.c.l.b16 %v2868
    %v2908 = vunpack.c.l.b16 %v2869
    %v2909 = vunpack.c.l.b16 %v2870
    %v2910 = vunpack.c.l.b16 %v2871
    %v2911 = vunpack.c.l.b16 %v2872
    %v2912 = vunpack.c.l.b16 %v2873
    %v2913 = vunpack.c.l.b16 %v2874
    %v2914 = vunpack.c.l.b16 %v2875
    %v2915 = vunpack.c.l.b16 %v2876
    %v2916 = vunpack.c.l.b16 %v2877
    %v2917 = vunpack.c.l.b16 %v2878
    %v2918 = vunpack.c.l.b16 %v2879
    %v2919 = vpack.c.b16 %v2904, %v2903
    %v2920 = vpack.c.b16 %v2906, %v2905
    %v2921 = vpack.c.b16 %v2908, %v2907
    %v2922 = vpack.c.b16 %v2910, %v2909
    %v2923 = vpack.c.b16 %v2912, %v2911
    %v2924 = vpack.c.b16 %v2914, %v2913
    %v2925 = vpack.c.b16 %v2916, %v2915
    %v2926 = vpack.c.b16 %v2918, %v2917
    %2935 = vmatprep.subr.bf16.mxu0 0
    %2936 = vmatpush1.bf16.msra.mxu0 %v2926
    %2937 = vmatprep.subr.bf16.mxu0 0
    %2938 = vmatpush1.bf16.msra.mxu0 %v2925
    %2939 = vmatprep.subr.bf16.mxu0 0
    %2940 = vmatpush1.bf16.msra.mxu0 %v2924
    %2941 = vmatprep.subr.bf16.mxu0 0
    %2942 = vmatpush1.bf16.msra.mxu0 %v2923
    %2943 = vmatprep.subr.bf16.mxu0 0
    %2944 = vmatpush1.bf16.msra.mxu0 %v2922
    %2945 = vmatprep.subr.bf16.mxu0 0
    %2946 = vmatpush1.bf16.msra.mxu0 %v2921
    %2947 = vmatprep.subr.bf16.mxu0 0
    %2948 = vmatpush1.bf16.msra.mxu0 %v2920
    %2949 = vmatprep.subr.bf16.mxu0 0
    %2950 = vmatpush1.bf16.msra.mxu0 %v2919
    %2951 = vmatprep.subr.bf16.mxu0 0
    %2952 = vmatpush2.bf16.msra.mxu0 0
    %2953 = vmatprep.subr.bf16.mxu0 0
    %2954 = vmatpush2.bf16.msra.mxu0 0
    %2955 = vmatprep.subr.bf16.mxu0 0
    %2956 = vmatpush2.bf16.msra.mxu0 0
    %2957 = vmatprep.subr.bf16.mxu0 0
    %2958 = vmatpush2.bf16.msra.mxu0 0
    %2959 = vmatprep.subr.bf16.mxu0 0
    %2960 = vmatpush2.bf16.msra.mxu0 0
    %2961 = vmatprep.subr.bf16.mxu0 0
    %2962 = vmatpush2.bf16.msra.mxu0 0
    %2963 = vmatprep.subr.bf16.mxu0 0
    %2964 = vmatpush2.bf16.msra.mxu0 0
    %2965 = vmatprep.subr.bf16.mxu0 0
    %2966 = vmatpush2.bf16.msra.mxu0 0
    %2967 = vmatprep.mubr.bf16.mxu0 0
    %2968 = vmatmul.mubr.bf16.gmra.mxu0 %v2863
    %v2969 = vpop.f32.mrf.mxu0
    %v2970 = vadd.f32 %v2885, %v2969
    %v2971 = vpop.f32.mrf.mxu0
    %v2972 = vpop.f32.mrf.mxu0
    %v2973 = vpop.f32.mrf.mxu0
    %2974 = vdwg.mxu0
    %2975 = vmax.xlane.f32.xlu0 %v2970
    %v2976 = vpop.xlane.xlu0 %2975
    %v2977 = vsub.f32 %v2970, %v2976
    %v2978 = vmul.f32 %v2977, 1.442695
    %v2979 = vpow.pop %v2978
    %2980 = vadd.xlane.f32.xlu0 %v2979
    %v2981 = vpop.xlane.xlu0 %2980
    %v2982 = vrcp.pop %v2981
    %v2983 = vmul.f32 %v2979, %v2982
    %2984 = vst [vmem:[#allocation17] sm:$0xff] %v2983
    // Predicated region
    $region106: #{tpu_custom_call.1} parent=1 // pred_check
      _
    $region107: #{tpu_custom_call.1} parent=1 // pred_check_branch
      %2986 = sbr.rel (0) target = $region109
    $region108: #{tpu_custom_call.1} parent=1 // pred_region
      %s2988 = ssub.s32 128, 128
      %2989 = vsyncadd [#allocation4], %s2988
      %s2991 = sshll.u32 [#allocation17], 4
      %s2992 = int_to_ptr.vmem [resolvable:$true] %s2991
      %2994 = dma.vmem_to_hbm [thread:$0]  %s2992, 128, %s17, [#allocation4]
    $region109: #{tpu_custom_call.1} parent=1 // pred_fallthru
      _
    // Predicated region
    $region110: #{tpu_custom_call.1} parent=1 // pred_check
      _
    $region111: #{tpu_custom_call.1} parent=1 // pred_check_branch
      %2996 = sbr.rel (0) target = $region113
    $region112: #{tpu_custom_call.1} parent=1 // pred_region
      %2997 = dma.done [#allocation4], 128
    $region113: #{tpu_custom_call.1} parent=1 // pred_fallthru
      _
    %2998 = vsyncpa [#allocation3], 1
    %2999 = vsyncpa [#allocation6], 1
    %3000 = vsyncpa [#allocation9], 1
    %3001 = vsyncpa [#allocation12], 1
    %3002 = vsyncpa [#allocation15], 1
    %3003 = vsyncpa [#allocation4], 1

</llo_original>
